<compile_context>
chip_gen: v5e
topology: v5e:2x2
jax: 0.10.0
libtpu: 0.0.40
codegen_flags: <defaults>
</compile_context>

<pallas_src>
import jax
import jax.numpy as jnp
from jax.experimental import pallas as pl
from jax.experimental.pallas import tpu as pltpu

# ------------------------- model dims (from __init__) -------------------------
NUM_FEATS = 11                  # numerical features
NUM_EMB = 32                    # nn.Linear(11, 32)
STR_DIM = 768                   # kobigbird hidden size
H1, H2, OUT = 400, 200, 100     # merge_layer: 800 -> 400 -> 200 -> 100
H1P, H2P, OUTP = 512, 256, 128  # zero-padded, lane-aligned MLP dims


def _round_down(x, m):
    return (x // m) * m


def _mish(x):
    # Mish(x) = x * tanh(softplus(x)); numerically-stable softplus.
    sp = jnp.where(x > 20.0, x, jnp.log1p(jnp.exp(jnp.minimum(x, 20.0))))
    return x * jnp.tanh(sp)


def _make_kernel(TB, TS, S, use_mxu_pool):
    s_exact = (S % TS == 0)

    def kernel(hidden_ref,   # [TB, TS, 768] native encoder dtype
               mask_ref,     # [TB, TS]      f32
               numb_ref,     # [TB, 512]     f32  (x_num @ Wn@W1[768:] + b1, precomputed)
               w1s_ref,      # [768, 512]    bf16
               w2_ref,       # [512, 256]    bf16
               b2_ref,       # [1, 256]      f32
               w3_ref,       # [256, 128]    bf16
               b3_ref,       # [1, 128]      f32
               out_ref,      # [TB, 128]     f32
               acc_ref,      # [TB, 768]     f32 scratch (masked-sum accumulator)
               msum_ref):    # [TB, 1]       f32 scratch (mask-sum accumulator)
        s = pl.program_id(1)

        # ---- init accumulators at the start of each S sweep -----------------
        @pl.when(s == 0)
        def _init():
            acc_ref[...] = jnp.zeros_like(acc_ref)
            msum_ref[...] = jnp.zeros_like(msum_ref)

        mask = mask_ref[...]                       # [TB, TS] f32
        hidden = hidden_ref[...]                   # [TB, TS, 768] native dtype

        if not s_exact:
            # Ragged S tail: the last S tile reads past the array; zero it so
            # garbage (possibly NaN) never reaches the accumulators.
            pos = s * TS + jax.lax.broadcasted_iota(jnp.int32, (TB, TS), 1)
            valid = pos < S
            mask = jnp.where(valid, mask, 0.0)
            hidden = jnp.where(valid[:, :, None], hidden, jnp.zeros_like(hidden))

        # ---- MeanPooling: streaming masked-sum over the S tile --------------
        if use_mxu_pool:
            # Block-diagonal mask @ flattened hidden -> masked per-row sum on
            # the MXU (idle otherwise); no [TB, TS, 768] f32 VPU intermediate.
            h2d = hidden.reshape(TB * TS, STR_DIM)
            row = jax.lax.broadcasted_iota(jnp.int32, (TB, TB * TS), 0)
            blk = jax.lax.broadcasted_iota(jnp.int32, (TB, TB * TS), 1) // TS
            tiled = jnp.concatenate([mask] * TB, axis=1)          # [TB, TB*TS]
            bd = jnp.where(row == blk, tiled, 0.0).astype(hidden.dtype)
            acc_ref[...] += jnp.dot(bd, h2d, preferred_element_type=jnp.float32)
        else:
            acc_ref[...] += jnp.sum(
                hidden.astype(jnp.float32) * mask[:, :, None], axis=1)

        msum_ref[...] += jnp.sum(mask, axis=1, keepdims=True)     # [TB, 1]

        # ---- finalize: divide + merge MLP, once per B tile -------------------
        @pl.when(s == pl.num_programs(1) - 1)
        def _finalize():
            sum_mask = jnp.maximum(msum_ref[...], 1e-9)           # torch.clamp(min=1e-9)
            str_emb = (acc_ref[...] / sum_mask).astype(jnp.bfloat16)  # [TB, 768]

            # concat([str, num]) @ W1 + b1 == str @ W1[:768] + (num @ Wn@W1[768:] + b1)
            h1 = (jnp.dot(str_emb, w1s_ref[...],
                          preferred_element_type=jnp.float32) + numb_ref[...])
            h1 = _mish(h1)                                        # Dropout(0.1) -> identity

            h2 = (jnp.dot(h1.astype(jnp.bfloat16), w2_ref[...],
                          preferred_element_type=jnp.float32) + b2_ref[...])
            h2 = _mish(h2)                                        # Dropout(0.1) -> identity

            out = (jnp.dot(h2.astype(jnp.bfloat16), w3_ref[...],
                           preferred_element_type=jnp.float32) + b3_ref[...])
            out_ref[...] = out.astype(out_ref.dtype)              # [TB, 128]

    return kernel


def candidate_embedder(last_hidden_state, attn_masks, x_numerical, params):
    """Everything downstream of the text encoder in one pipelined Pallas call."""
    B, S, D = last_hidden_state.shape
    assert D == STR_DIM

    # --- generation-aware sizing (v5e/v6e: 128 MiB VMEM, v7x: 64 MiB) --------
    try:
        vmem_phys = int(pltpu.get_tpu_info().vmem_capacity_bytes)
        if vmem_phys <= 0:
            raise ValueError
    except Exception:
        vmem_phys = 64 * 1024 * 1024            # conservative (v7x per-core)
    vmem_limit = max(32 * 1024 * 1024,
                     min(int(vmem_phys * 3 // 4), 112 * 1024 * 1024))

    # Batch tile: no B padding ever; small batches get TB = B, larger ones
    # tile by 8 (ragged tails handled by Pallas block clamping).
    TB = B if B <= 16 else 8

    # Sequence tile: budget ~1/3 of the VMEM limit for the double-buffered
    # hidden tile; prefer TS == S (no S tail masking at all).
    itemsize = jnp.dtype(last_hidden_state.dtype).itemsize
    budget = vmem_limit // 3
    ts_cap = max(128, min(2048,
                          _round_down(budget // (2 * TB * STR_DIM * itemsize), 128)))
    if S <= ts_cap:
        TS = S
    else:
        TS = ts_cap
        for cand in range(ts_cap, 127, -128):   # prefer a divisor of S
            if S % cand == 0:
                TS = cand
                break

    # MXU pooling only when tiles are lane-aligned and exact (big-tile regime,
    # where it matters on v7x); tiny/ragged tiles use the VPU path.
    use_mxu_pool = (TS % 128 == 0) and (S % TS == 0) and (B % TB == 0)

    mask = attn_masks.astype(jnp.float32)                          # [B, S] (tiny)
    # num_embedder folded into merge-layer W1 host-side: tiny [B, 512] f32.
    num_bias = x_numerical.astype(jnp.float32) @ params["wnf"] + params["b1"]

    grid = (pl.cdiv(B, TB), pl.cdiv(S, TS))
    const = lambda b, s: (0, 0)                 # weights: fetched once, resident

    kernel = _make_kernel(TB, TS, S, use_mxu_pool)

    grid_spec = pltpu.PrefetchScalarGridSpec(
        num_scalar_prefetch=0,
        grid=grid,
        in_specs=[
            pl.BlockSpec((TB, TS, STR_DIM), lambda b, s: (b, s, 0)),  # hidden stream (native dtype)
            pl.BlockSpec((TB, TS), lambda b, s: (b, s)),              # mask stream
            pl.BlockSpec((TB, H1P), lambda b, s: (b, 0)),             # fused num bias (per B tile)
            pl.BlockSpec((STR_DIM, H1P), const),
            pl.BlockSpec((H1P, H2P), const),
            pl.BlockSpec((1, H2P), const),
            pl.BlockSpec((H2P, OUTP), const),
            pl.BlockSpec((1, OUTP), const),
        ],
        out_specs=pl.BlockSpec((TB, OUTP), lambda b, s: (b, 0)),      # resident over S axis
        scratch_shapes=[
            pltpu.VMEM((TB, STR_DIM), jnp.float32),   # pooled-sum accumulator
            pltpu.VMEM((TB, 1), jnp.float32),         # mask-sum accumulator
        ],
    )

    out = pl.pallas_call(
        kernel,
        out_shape=jax.ShapeDtypeStruct((B, OUTP), jnp.float32),
        grid_spec=grid_spec,
        compiler_params=pltpu.CompilerParams(
            dimension_semantics=("parallel", "arbitrary"),  # B parallel, S reduction last
            vmem_limit_bytes=vmem_limit,
        ),
    )(last_hidden_state, mask, num_bias,
      params["w1s"], params["w2"], params["b2"], params["w3"], params["b3"])

    return out[:, :OUT]     # strip the zero-padded output lanes


# ----------------------- parameter prep (host-side, once) ---------------------
def init_raw_params(key):
    """PyTorch-equivalent params, stored as [in_features, out_features]."""
    ks = jax.random.split(key, 8)
    s = 0.02
    return {
        "wn": s * jax.random.normal(ks[0], (NUM_FEATS, NUM_EMB), jnp.float32),
        "bn": s * jax.random.normal(ks[1], (NUM_EMB,), jnp.float32),
        "w1": s * jax.random.normal(ks[2], (STR_DIM + NUM_EMB, H1), jnp.float32),
        "b1": s * jax.random.normal(ks[3], (H1,), jnp.float32),
        "w2": s * jax.random.normal(ks[4], (H1, H2), jnp.float32),
        "b2": s * jax.random.normal(ks[5], (H2,), jnp.float32),
        "w3": s * jax.random.normal(ks[6], (H2, OUT), jnp.float32),
        "b3": s * jax.random.normal(ks[7], (OUT,), jnp.float32),
    }


def prepare_params(raw):
    """Fold num_embedder into W1, zero-pad to lane-aligned dims, cast big weights to bf16."""
    w1s = raw["w1"][:STR_DIM]            # [768, 400]
    w1n = raw["w1"][STR_DIM:]            # [32, 400]
    wnf = raw["wn"] @ w1n                # [11, 400]   (Wn fused with W1's num block)
    b1f = raw["b1"] + raw["bn"] @ w1n    # [400]

    def pad_w(w, rows, cols, dtype):
        return jnp.pad(w, ((0, rows - w.shape[0]), (0, cols - w.shape[1]))).astype(dtype)

    def pad_b(b, cols):
        return jnp.pad(b, (0, cols - b.shape[0])).reshape(1, cols).astype(jnp.float32)

    return {
        "w1s": pad_w(w1s, STR_DIM, H1P, jnp.bfloat16),
        "wnf": pad_w(wnf, NUM_FEATS, H1P, jnp.float32),   # stays f32 (host-side matmul)
        "b1": pad_b(b1f, H1P),
        "w2": pad_w(raw["w2"], H1P, H2P, jnp.bfloat16),
        "b2": pad_b(raw["b2"], H2P),
        "w3": pad_w(raw["w3"], H2P, OUTP, jnp.bfloat16),
        "b3": pad_b(raw["b3"], OUTP),
    }


def reference_forward(last_hidden_state, attn_masks, x_numerical, raw):
    """Pure-JAX f32 reference of the PyTorch forward (post-encoder)."""
    h = last_hidden_state.astype(jnp.float32)
    m = attn_masks.astype(jnp.float32)[:, :, None]
    summed = jnp.sum(h * m, axis=1)
    cnt = jnp.maximum(jnp.sum(m, axis=1), 1e-9)
    str_emb = summed / cnt
    num_emb = x_numerical @ raw["wn"] + raw["bn"]
    merged = jnp.concatenate([str_emb, num_emb], axis=1)
    mish = lambda x: x * jnp.tanh(jax.nn.softplus(x))
    h1 = mish(merged @ raw["w1"] + raw["b1"])
    h2 = mish(h1 @ raw["w2"] + raw["b2"])
    return h2 @ raw["w3"] + raw["b3"]


if __name__ == "__main__":
    key = jax.random.PRNGKey(0)
    k_par, k_num, k_ids, k_emb = jax.random.split(key, 4)

    B, S = 2, 8
    VOCAB = 64

    raw = init_raw_params(k_par)
    params = prepare_params(raw)

    # module inputs
    x_numerical = jax.random.normal(k_num, (B, NUM_FEATS), jnp.float32)
    x_input_ids = jax.random.randint(k_ids, (B, S), 0, VOCAB, jnp.int32)
    x_attn_masks = jnp.array([[1, 1, 1, 1, 1, 0, 0, 0],
                              [1, 1, 1, 1, 1, 1, 1, 1]], jnp.int32)

    # TODO(synk): kobigbird-bert-base transformer not reproduced; deterministic
    #             bf16 embedding-table lookup stands in for last_hidden_state.
    emb_table = (0.02 * jax.random.normal(k_emb, (VOCAB, STR_DIM), jnp.float32)
                 ).astype(jnp.bfloat16)
    last_hidden_state = emb_table[x_input_ids]            # [B, S, 768] bf16 (no wrapper cast)

    out = candidate_embedder(last_hidden_state, x_attn_masks, x_numerical, params)
    out = jax.block_until_ready(out)

    ref = reference_forward(last_hidden_state, x_attn_masks, x_numerical, raw)
    assert out.shape == (B, OUT) and out.dtype == jnp.float32
    assert bool(jnp.all(jnp.isfinite(out)))
    assert bool(jnp.allclose(out, ref, atol=2e-2, rtol=2e-1))   # bf16-weight tolerance
    print("KERNEL_OK")
</pallas_src>

<mosaic_0001>
module attributes {stable_mosaic.version = 11 : i64} {
  func.func @kernel(%arg0: i32, %arg1: i32, %arg2: memref<2x8x768xbf16, #tpu.memory_space<vmem>>, %arg3: memref<2x8xf32, #tpu.memory_space<vmem>>, %arg4: memref<2x512xf32, #tpu.memory_space<vmem>>, %arg5: memref<768x512xbf16, #tpu.memory_space<vmem>>, %arg6: memref<512x256xbf16, #tpu.memory_space<vmem>>, %arg7: memref<1x256xf32, #tpu.memory_space<vmem>>, %arg8: memref<256x128xbf16, #tpu.memory_space<vmem>>, %arg9: memref<1x128xf32, #tpu.memory_space<vmem>>, %arg10: memref<2x128xf32, #tpu.memory_space<vmem>>, %arg11: memref<2x768xf32, #tpu.memory_space<vmem>>, %arg12: memref<2x1xf32, #tpu.memory_space<vmem>>) attributes {dimension_semantics = [#tpu.dimension_semantics<parallel>, #tpu.dimension_semantics<arbitrary>], iteration_bounds = array<i64: 1, 1>, scalar_prefetch = 0 : i64, scratch_operands = 2 : i64, tpu.core_type = #tpu.core_type<tc>, window_params = [{transform_indices = @transform_0, window_bounds = array<i64: 2, 8, 768>}, {transform_indices = @transform_1, window_bounds = array<i64: 2, 8>}, {transform_indices = @transform_2, window_bounds = array<i64: 2, 512>}, {pipeline_mode = #tpu.pipeline_mode<synchronous>, transform_indices = @transform_3, window_bounds = array<i64: 768, 512>}, {pipeline_mode = #tpu.pipeline_mode<synchronous>, transform_indices = @transform_4, window_bounds = array<i64: 512, 256>}, {pipeline_mode = #tpu.pipeline_mode<synchronous>, transform_indices = @transform_5, window_bounds = array<i64: 1, 256>}, {pipeline_mode = #tpu.pipeline_mode<synchronous>, transform_indices = @transform_6, window_bounds = array<i64: 256, 128>}, {pipeline_mode = #tpu.pipeline_mode<synchronous>, transform_indices = @transform_7, window_bounds = array<i64: 1, 128>}, {transform_indices = @transform_8, window_bounds = array<i64: 2, 128>}]} {
    %c0_i32 = arith.constant 0 : i32
    %0 = arith.cmpi eq, %arg1, %c0_i32 : i32
    %1 = arith.extui %0 : i1 to i32
    %c0_i32_0 = arith.constant 0 : i32
    %2 = arith.cmpi ne, %1, %c0_i32_0 : i32
    scf.if %2 {
      %cst_16 = arith.constant 0.000000e+00 : f32
      %21 = vector.broadcast %cst_16 : f32 to vector<2x768xf32>
      %c0_17 = arith.constant 0 : index
      %c0_18 = arith.constant 0 : index
      %22 = vector.load %arg11[%c0_17, %c0_18] : memref<2x768xf32, #tpu.memory_space<vmem>>, vector<2x768xf32>
      tpu.vector_store %arg11[%c0_17, %c0_18], %21 {strides = array<i32>} : memref<2x768xf32, #tpu.memory_space<vmem>>, vector<2x768xf32>,
      %cst_19 = arith.constant 0.000000e+00 : f32
      %23 = vector.broadcast %cst_19 : f32 to vector<2x1xf32>
      %c0_20 = arith.constant 0 : index
      %c0_21 = arith.constant 0 : index
      %24 = vector.load %arg12[%c0_20, %c0_21] : memref<2x1xf32, #tpu.memory_space<vmem>>, vector<2x1xf32>
      tpu.vector_store %arg12[%c0_20, %c0_21], %23 {strides = array<i32>} : memref<2x1xf32, #tpu.memory_space<vmem>>, vector<2x1xf32>,
    } else {
    }
    %c0 = arith.constant 0 : index
    %c0_1 = arith.constant 0 : index
    %3 = vector.load %arg3[%c0, %c0_1] : memref<2x8xf32, #tpu.memory_space<vmem>>, vector<2x8xf32>
    %c0_2 = arith.constant 0 : index
    %c0_3 = arith.constant 0 : index
    %c0_4 = arith.constant 0 : index
    %4 = vector.load %arg2[%c0_2, %c0_3, %c0_4] : memref<2x8x768xbf16, #tpu.memory_space<vmem>>, vector<2x8x768xbf16>
    %c0_5 = arith.constant 0 : index
    %c0_6 = arith.constant 0 : index
    %5 = vector.load %arg11[%c0_5, %c0_6] : memref<2x768xf32, #tpu.memory_space<vmem>>, vector<2x768xf32>
    %6 = arith.extf %4 : vector<2x8x768xbf16> to vector<2x8x768xf32>
    %7 = vector.shape_cast %3 : vector<2x8xf32> to vector<2x8x1xf32>
    %8 = vector.broadcast %7 : vector<2x8x1xf32> to vector<2x8x768xf32>
    %9 = arith.mulf %6, %8 : vector<2x8x768xf32>
    %cst = arith.constant dense<0.000000e+00> : vector<2x768xf32>
    %10 = vector.multi_reduction <add>, %9, %cst [1] : vector<2x8x768xf32> to vector<2x768xf32>
    %11 = arith.addf %5, %10 : vector<2x768xf32>
    %c0_7 = arith.constant 0 : index
    %c0_8 = arith.constant 0 : index
    %12 = vector.load %arg11[%c0_7, %c0_8] : memref<2x768xf32, #tpu.memory_space<vmem>>, vector<2x768xf32>
    tpu.vector_store %arg11[%c0_7, %c0_8], %11 {strides = array<i32>} : memref<2x768xf32, #tpu.memory_space<vmem>>, vector<2x768xf32>,
    %c0_9 = arith.constant 0 : index
    %c0_10 = arith.constant 0 : index
    %13 = vector.load %arg12[%c0_9, %c0_10] : memref<2x1xf32, #tpu.memory_space<vmem>>, vector<2x1xf32>
    %cst_11 = arith.constant dense<0.000000e+00> : vector<2xf32>
    %14 = vector.multi_reduction <add>, %3, %cst_11 [1] : vector<2x8xf32> to vector<2xf32>
    %15 = vector.shape_cast %14 : vector<2xf32> to vector<2x1xf32>
    %16 = arith.addf %13, %15 : vector<2x1xf32>
    %c0_12 = arith.constant 0 : index
    %c0_13 = arith.constant 0 : index
    %17 = vector.load %arg12[%c0_12, %c0_13] : memref<2x1xf32, #tpu.memory_space<vmem>>, vector<2x1xf32>
    tpu.vector_store %arg12[%c0_12, %c0_13], %16 {strides = array<i32>} : memref<2x1xf32, #tpu.memory_space<vmem>>, vector<2x1xf32>,
    %c0_i32_14 = arith.constant 0 : i32
    %18 = arith.cmpi eq, %arg1, %c0_i32_14 : i32
    %19 = arith.extui %18 : i1 to i32
    %c0_i32_15 = arith.constant 0 : i32
    %20 = arith.cmpi ne, %19, %c0_i32_15 : i32
    scf.if %20 {
      %c0_16 = arith.constant 0 : index
      %c0_17 = arith.constant 0 : index
      %21 = vector.load %arg12[%c0_16, %c0_17] : memref<2x1xf32, #tpu.memory_space<vmem>>, vector<2x1xf32>
      %cst_18 = arith.constant 9.99999971E-10 : f32
      %22 = vector.broadcast %cst_18 : f32 to vector<2x1xf32>
      %23 = arith.maximumf %21, %22 : vector<2x1xf32>
      %c0_19 = arith.constant 0 : index
      %c0_20 = arith.constant 0 : index
      %24 = vector.load %arg11[%c0_19, %c0_20] : memref<2x768xf32, #tpu.memory_space<vmem>>, vector<2x768xf32>
      %25 = vector.broadcast %23 : vector<2x1xf32> to vector<2x768xf32>
      %26 = arith.divf %24, %25 : vector<2x768xf32>
      %27 = arith.truncf %26 : vector<2x768xf32> to vector<2x768xbf16>
      %c0_21 = arith.constant 0 : index
      %c0_22 = arith.constant 0 : index
      %28 = vector.load %arg5[%c0_21, %c0_22] : memref<768x512xbf16, #tpu.memory_space<vmem>>, vector<768x512xbf16>
      %cst_23 = arith.constant dense<0.000000e+00> : vector<2x512xf32>
      %29 = tpu.matmul %27, %28, %cst_23 {dimension_numbers = #tpu.dot_dimension_numbers<[1], [0], [0], [1], [0, 0, 1, 1], [], []>} : vector<2x768xbf16>, vector<768x512xbf16>, vector<2x512xf32> -> vector<2x512xf32>
      %c0_24 = arith.constant 0 : index
      %c0_25 = arith.constant 0 : index
      %30 = vector.load %arg4[%c0_24, %c0_25] : memref<2x512xf32, #tpu.memory_space<vmem>>, vector<2x512xf32>
      %31 = arith.addf %29, %30 : vector<2x512xf32>
      %cst_26 = arith.constant 2.000000e+01 : f32
      %32 = vector.broadcast %cst_26 : f32 to vector<2x512xf32>
      %33 = arith.cmpf ogt, %31, %32 : vector<2x512xf32>
      %cst_27 = arith.constant 2.000000e+01 : f32
      %34 = vector.broadcast %cst_27 : f32 to vector<2x512xf32>
      %35 = arith.minimumf %31, %34 : vector<2x512xf32>
      %36 = math.exp %35 : vector<2x512xf32>
      %37 = math.log1p %36 : vector<2x512xf32>
      %38 = arith.select %33, %31, %37 : vector<2x512xi1>, vector<2x512xf32>
      %39 = math.tanh %38 : vector<2x512xf32>
      %40 = arith.mulf %31, %39 : vector<2x512xf32>
      %41 = arith.truncf %40 : vector<2x512xf32> to vector<2x512xbf16>
      %c0_28 = arith.constant 0 : index
      %c0_29 = arith.constant 0 : index
      %42 = vector.load %arg6[%c0_28, %c0_29] : memref<512x256xbf16, #tpu.memory_space<vmem>>, vector<512x256xbf16>
      %cst_30 = arith.constant dense<0.000000e+00> : vector<2x256xf32>
      %43 = tpu.matmul %41, %42, %cst_30 {dimension_numbers = #tpu.dot_dimension_numbers<[1], [0], [0], [1], [0, 0, 1, 1], [], []>} : vector<2x512xbf16>, vector<512x256xbf16>, vector<2x256xf32> -> vector<2x256xf32>
      %c0_31 = arith.constant 0 : index
      %c0_32 = arith.constant 0 : index
      %44 = vector.load %arg7[%c0_31, %c0_32] : memref<1x256xf32, #tpu.memory_space<vmem>>, vector<1x256xf32>
      %45 = vector.broadcast %44 : vector<1x256xf32> to vector<2x256xf32>
      %46 = arith.addf %43, %45 : vector<2x256xf32>
      %cst_33 = arith.constant 2.000000e+01 : f32
      %47 = vector.broadcast %cst_33 : f32 to vector<2x256xf32>
      %48 = arith.cmpf ogt, %46, %47 : vector<2x256xf32>
      %cst_34 = arith.constant 2.000000e+01 : f32
      %49 = vector.broadcast %cst_34 : f32 to vector<2x256xf32>
      %50 = arith.minimumf %46, %49 : vector<2x256xf32>
      %51 = math.exp %50 : vector<2x256xf32>
      %52 = math.log1p %51 : vector<2x256xf32>
      %53 = arith.select %48, %46, %52 : vector<2x256xi1>, vector<2x256xf32>
      %54 = math.tanh %53 : vector<2x256xf32>
      %55 = arith.mulf %46, %54 : vector<2x256xf32>
      %56 = arith.truncf %55 : vector<2x256xf32> to vector<2x256xbf16>
      %c0_35 = arith.constant 0 : index
      %c0_36 = arith.constant 0 : index
      %57 = vector.load %arg8[%c0_35, %c0_36] : memref<256x128xbf16, #tpu.memory_space<vmem>>, vector<256x128xbf16>
      %cst_37 = arith.constant dense<0.000000e+00> : vector<2x128xf32>
      %58 = tpu.matmul %56, %57, %cst_37 {dimension_numbers = #tpu.dot_dimension_numbers<[1], [0], [0], [1], [0, 0, 1, 1], [], []>} : vector<2x256xbf16>, vector<256x128xbf16>, vector<2x128xf32> -> vector<2x128xf32>
      %c0_38 = arith.constant 0 : index
      %c0_39 = arith.constant 0 : index
      %59 = vector.load %arg9[%c0_38, %c0_39] : memref<1x128xf32, #tpu.memory_space<vmem>>, vector<1x128xf32>
      %60 = vector.broadcast %59 : vector<1x128xf32> to vector<2x128xf32>
      %61 = arith.addf %58, %60 : vector<2x128xf32>
      %c0_40 = arith.constant 0 : index
      %c0_41 = arith.constant 0 : index
      %62 = vector.load %arg10[%c0_40, %c0_41] : memref<2x128xf32, #tpu.memory_space<vmem>>, vector<2x128xf32>
      tpu.vector_store %arg10[%c0_40, %c0_41], %61 {strides = array<i32>} : memref<2x128xf32, #tpu.memory_space<vmem>>, vector<2x128xf32>,
    } else {
    }
    return
  }
  func.func @transform_0(%arg0: i32, %arg1: i32) -> (i32, i32, i32) {
    %c0_i32 = arith.constant 0 : i32
    %c0_i32_0 = arith.constant 0 : i32
    return %arg0, %arg1, %c0_i32 : i32, i32, i32
  }
  func.func @transform_1(%arg0: i32, %arg1: i32) -> (i32, i32) {
    %c0_i32 = arith.constant 0 : i32
    return %arg0, %arg1 : i32, i32
  }
  func.func @transform_2(%arg0: i32, %arg1: i32) -> (i32, i32) {
    %c0_i32 = arith.constant 0 : i32
    %c0_i32_0 = arith.constant 0 : i32
    return %arg0, %c0_i32 : i32, i32
  }
  func.func @transform_3(%arg0: i32, %arg1: i32) -> (i32, i32) {
    %c0_i32 = arith.constant 0 : i32
    %c0_i32_0 = arith.constant 0 : i32
    %c0_i32_1 = arith.constant 0 : i32
    return %c0_i32, %c0_i32_0 : i32, i32
  }
  func.func @transform_4(%arg0: i32, %arg1: i32) -> (i32, i32) {
    %c0_i32 = arith.constant 0 : i32
    %c0_i32_0 = arith.constant 0 : i32
    %c0_i32_1 = arith.constant 0 : i32
    return %c0_i32, %c0_i32_0 : i32, i32
  }
  func.func @transform_5(%arg0: i32, %arg1: i32) -> (i32, i32) {
    %c0_i32 = arith.constant 0 : i32
    %c0_i32_0 = arith.constant 0 : i32
    %c0_i32_1 = arith.constant 0 : i32
    return %c0_i32, %c0_i32_0 : i32, i32
  }
  func.func @transform_6(%arg0: i32, %arg1: i32) -> (i32, i32) {
    %c0_i32 = arith.constant 0 : i32
    %c0_i32_0 = arith.constant 0 : i32
    %c0_i32_1 = arith.constant 0 : i32
    return %c0_i32, %c0_i32_0 : i32, i32
  }
  func.func @transform_7(%arg0: i32, %arg1: i32) -> (i32, i32) {
    %c0_i32 = arith.constant 0 : i32
    %c0_i32_0 = arith.constant 0 : i32
    %c0_i32_1 = arith.constant 0 : i32
    return %c0_i32, %c0_i32_0 : i32, i32
  }
  func.func @transform_8(%arg0: i32, %arg1: i32) -> (i32, i32) {
    %c0_i32 = arith.constant 0 : i32
    %c0_i32_0 = arith.constant 0 : i32
    return %arg0, %c0_i32 : i32, i32
  }
}

</mosaic_0001>

<llo_original>
// kernel: tpu_custom_call.1
$region0: #{tpu_custom_call.1}
  #allocation0 [shape = 'u32[]', space=smem, size = 0x4, offset = 0x4, fixed_abs, tag = 'smem constant byte address 0x4 - core index']
  #allocation1 [shape = 'u32[72,128]{1,0:T(1,128)}', space=vmem, size = 0x9000, scoped, tag = 'internal scratch']
  #allocation2 [shape = 'f32[2,768]{1,0:T(2,128)}', space=vmem, size = 0x1800, scoped, tag = 'scratch operand']
  #allocation3 [shape = 'f32[2,1]{1,0:T(2,128)}', space=vmem, size = 0x400, scoped, tag = 'scratch operand']
  %s0 = inlined_call_operand.hbm [shape: bf16[2,8,768], index: 0, kind: input, shape index: {}]
  %s1 = inlined_call_operand.hbm [shape: f32[2,8], index: 1, kind: input, shape index: {}]
  %s2 = inlined_call_operand.hbm [shape: f32[2,512], index: 2, kind: input, shape index: {}]
  %s3 = inlined_call_operand.hbm [shape: bf16[768,512], index: 3, kind: input, shape index: {}]
  %s4 = inlined_call_operand.hbm [shape: bf16[512,256], index: 4, kind: input, shape index: {}]
  %s5 = inlined_call_operand.vmem [shape: f32[1,256], index: 5, kind: input, shape index: {}]
  %s6 = inlined_call_operand.hbm [shape: bf16[256,128], index: 6, kind: input, shape index: {}]
  %s7 = inlined_call_operand.vmem [shape: f32[1,128], index: 7, kind: input, shape index: {}]
  %s8 = inlined_call_operand.hbm [shape: f32[2,128], index: 8, kind: output, shape index: {}]
  %s9 = sld [smem:[#allocation0]]
  $region74: #{tpu_custom_call.1} parent=0
    _
  %s11 = ssub.s32 1, %s9
  %s12 = scalar_select 0, %s11, %s9
  $region1: #{tpu_custom_call.1} parent=0
    #allocation4 [shape = 'u8[24576]{0}', space=vmem, size = 0x6000, scoped, tag = 'input window, operand 0, single buffered']
    #allocation5 [shape = 's32[1]{0}', space=sflag, size = 0x4, scoped, tag = 'scoped memory for tpu_custom_call.1']
    #allocation6 [shape = 's32[1]{0}', space=sflag, size = 0x4, scoped, tag = 'scoped memory for tpu_custom_call.1']
    #allocation7 [shape = 'u8[1024]{0}', space=vmem, size = 0x400, scoped, tag = 'input window, operand 1, single buffered']
    #allocation8 [shape = 's32[1]{0}', space=sflag, size = 0x4, scoped, tag = 'scoped memory for tpu_custom_call.1']
    #allocation9 [shape = 'u8[4096]{0}', space=vmem, size = 0x1000, scoped, tag = 'input window, operand 2, single buffered']
    #allocation10 [shape = 'u8[786432]{0}', space=vmem, size = 0xc0000, scoped, tag = 'input window, operand 3, single buffered']
    #allocation11 [shape = 's32[1]{0}', space=sflag, size = 0x4, scoped, tag = 'scoped memory for tpu_custom_call.1']
    #allocation12 [shape = 'u8[262144]{0}', space=vmem, size = 0x40000, scoped, tag = 'input window, operand 4, single buffered']
    #allocation13 [shape = 'u8[65536]{0}', space=vmem, size = 0x10000, scoped, tag = 'input window, operand 6, single buffered']
    #allocation14 [shape = 's32[1]{0}', space=sflag, size = 0x4, scoped, tag = 'scoped memory for tpu_custom_call.1']
    #allocation15 [shape = 'u8[1024]{0}', space=vmem, size = 0x400, scoped, tag = 'output window, operand 0, single buffered']
    %13 = vsyncpa [#allocation5], 0
    %14 = vsyncpa [#allocation8], 0
    %15 = vsyncpa [#allocation11], 0
    %16 = vsyncpa [#allocation14], 0
    %17 = vsyncpa [#allocation6], 0
    // Predicated region
    $region2: #{tpu_custom_call.1} parent=1 // pred_check
      _
    $region3: #{tpu_custom_call.1} parent=1 // pred_check_branch
      %19 = sbr.rel (0) target = $region5
    $region4: #{tpu_custom_call.1} parent=1 // pred_region
      %21 = vsyncadd [#allocation5], 0
      %s22 = sshll.u32 %s0, 4
      %s23 = int_to_ptr.hbm [resolvable:$true] %s22
      %s24 = sshll.u32 [#allocation4], 4
      %s25 = int_to_ptr.vmem [resolvable:$true] %s24
      %30 = dma.hbm_to_vmem [thread:$0]  %s23, 768, %s25, [#allocation5], 384, 384, 24
    $region5: #{tpu_custom_call.1} parent=1 // pred_fallthru
      _
    // Predicated region
    $region6: #{tpu_custom_call.1} parent=1 // pred_check
      _
    $region7: #{tpu_custom_call.1} parent=1 // pred_check_branch
      %32 = sbr.rel (0) target = $region9
    $region8: #{tpu_custom_call.1} parent=1 // pred_region
      %34 = vsyncadd [#allocation8], 0
      %s36 = sshll.u32 %s1, 4
      %s37 = int_to_ptr.hbm [resolvable:$true] %s36
      %s38 = sshll.u32 [#allocation7], 4
      %s39 = int_to_ptr.vmem [resolvable:$true] %s38
      %41 = dma.hbm_to_vmem [thread:$0]  %s37, 32, %s39, [#allocation8]
    $region9: #{tpu_custom_call.1} parent=1 // pred_fallthru
      _
    // Predicated region
    $region10: #{tpu_custom_call.1} parent=1 // pred_check
      _
    $region11: #{tpu_custom_call.1} parent=1 // pred_check_branch
      %43 = sbr.rel (0) target = $region13
    $region12: #{tpu_custom_call.1} parent=1 // pred_region
      %45 = vsyncadd [#allocation8], 0
      %s47 = sshll.u32 %s2, 4
      %s48 = int_to_ptr.hbm [resolvable:$true] %s47
      %s49 = sshll.u32 [#allocation9], 4
      %s50 = int_to_ptr.vmem [resolvable:$true] %s49
      %52 = dma.hbm_to_vmem [thread:$0]  %s48, 128, %s50, [#allocation8]
    $region13: #{tpu_custom_call.1} parent=1 // pred_fallthru
      _
    // Predicated region
    $region14: #{tpu_custom_call.1} parent=1 // pred_check
      _
    $region15: #{tpu_custom_call.1} parent=1 // pred_check_branch
      %54 = sbr.rel (0) target = $region17
    $region16: #{tpu_custom_call.1} parent=1 // pred_region
      %56 = vsyncadd [#allocation11], 0
      %s57 = sshll.u32 %s3, 4
      %s58 = int_to_ptr.hbm [resolvable:$true] %s57
      %s59 = sshll.u32 [#allocation10], 4
      %s60 = int_to_ptr.vmem [resolvable:$true] %s59
      %65 = dma.hbm_to_vmem [thread:$0]  %s58, 24576, %s60, [#allocation11], 256, 256, 16
    $region17: #{tpu_custom_call.1} parent=1 // pred_fallthru
      _
    // Predicated region
    $region18: #{tpu_custom_call.1} parent=1 // pred_check
      _
    $region19: #{tpu_custom_call.1} parent=1 // pred_check_branch
      %67 = sbr.rel (0) target = $region21
    $region20: #{tpu_custom_call.1} parent=1 // pred_region
      %69 = vsyncadd [#allocation11], 0
      %s70 = sshll.u32 %s4, 4
      %s71 = int_to_ptr.hbm [resolvable:$true] %s70
      %s72 = sshll.u32 [#allocation12], 4
      %s73 = int_to_ptr.vmem [resolvable:$true] %s72
      %78 = dma.hbm_to_vmem [thread:$0]  %s71, 8192, %s73, [#allocation11], 128, 128, 8
    $region21: #{tpu_custom_call.1} parent=1 // pred_fallthru
      _
    // Predicated region
    $region22: #{tpu_custom_call.1} parent=1 // pred_check
      _
    $region23: #{tpu_custom_call.1} parent=1 // pred_check_branch
      %80 = sbr.rel (0) target = $region25
    $region24: #{tpu_custom_call.1} parent=1 // pred_region
      _
    $region25: #{tpu_custom_call.1} parent=1 // pred_fallthru
      _
    // Predicated region
    $region26: #{tpu_custom_call.1} parent=1 // pred_check
      _
    $region27: #{tpu_custom_call.1} parent=1 // pred_check_branch
      %82 = sbr.rel (0) target = $region29
    $region28: #{tpu_custom_call.1} parent=1 // pred_region
      %84 = vsyncadd [#allocation14], 0
      %s85 = sshll.u32 %s6, 4
      %s86 = int_to_ptr.hbm [resolvable:$true] %s85
      %s87 = sshll.u32 [#allocation13], 4
      %s88 = int_to_ptr.vmem [resolvable:$true] %s87
      %93 = dma.hbm_to_vmem [thread:$0]  %s86, 2048, %s88, [#allocation14], 64, 64, 4
    $region29: #{tpu_custom_call.1} parent=1 // pred_fallthru
      _
    // Predicated region
    $region30: #{tpu_custom_call.1} parent=1 // pred_check
      _
    $region31: #{tpu_custom_call.1} parent=1 // pred_check_branch
      %95 = sbr.rel (0) target = $region33
    $region32: #{tpu_custom_call.1} parent=1 // pred_region
      _
    $region33: #{tpu_custom_call.1} parent=1 // pred_fallthru
      _
    // Predicated region
    $region34: #{tpu_custom_call.1} parent=1 // pred_check
      _
    $region35: #{tpu_custom_call.1} parent=1 // pred_check_branch
      %97 = sbr.rel (0) target = $region37
    $region36: #{tpu_custom_call.1} parent=1 // pred_region
      %99 = dma.done [#allocation5], 768
    $region37: #{tpu_custom_call.1} parent=1 // pred_fallthru
      _
    // Predicated region
    $region38: #{tpu_custom_call.1} parent=1 // pred_check
      _
    $region39: #{tpu_custom_call.1} parent=1 // pred_check_branch
      %101 = sbr.rel (0) target = $region41
    $region40: #{tpu_custom_call.1} parent=1 // pred_region
      %103 = dma.done [#allocation8], 32
    $region41: #{tpu_custom_call.1} parent=1 // pred_fallthru
      _
    // Predicated region
    $region42: #{tpu_custom_call.1} parent=1 // pred_check
      _
    $region43: #{tpu_custom_call.1} parent=1 // pred_check_branch
      %105 = sbr.rel (0) target = $region45
    $region44: #{tpu_custom_call.1} parent=1 // pred_region
      %107 = dma.done [#allocation8], 128
    $region45: #{tpu_custom_call.1} parent=1 // pred_fallthru
      _
    // Predicated region
    $region46: #{tpu_custom_call.1} parent=1 // pred_check
      _
    $region47: #{tpu_custom_call.1} parent=1 // pred_check_branch
      %109 = sbr.rel (0) target = $region49
    $region48: #{tpu_custom_call.1} parent=1 // pred_region
      %111 = dma.done [#allocation11], 24576
    $region49: #{tpu_custom_call.1} parent=1 // pred_fallthru
      _
    // Predicated region
    $region50: #{tpu_custom_call.1} parent=1 // pred_check
      _
    $region51: #{tpu_custom_call.1} parent=1 // pred_check_branch
      %113 = sbr.rel (0) target = $region53
    $region52: #{tpu_custom_call.1} parent=1 // pred_region
      %115 = dma.done [#allocation11], 8192
    $region53: #{tpu_custom_call.1} parent=1 // pred_fallthru
      _
    // Predicated region
    $region54: #{tpu_custom_call.1} parent=1 // pred_check
      _
    $region55: #{tpu_custom_call.1} parent=1 // pred_check_branch
      %117 = sbr.rel (0) target = $region57
    $region56: #{tpu_custom_call.1} parent=1 // pred_region
      %119 = dma.done [#allocation14], 2048
    $region57: #{tpu_custom_call.1} parent=1 // pred_fallthru
      _
    %p120 = scmp.eq.s32.totalorder 0, 0
    // Predicated region
    $region58: #{tpu_custom_call.1} parent=1 // pred_check
      %p121 = pneg %p120
    $region59: #{tpu_custom_call.1} parent=1 // pred_check_branch
      %123 = sbr.rel (%p121) target = $region61
    $region60: #{tpu_custom_call.1} parent=1 // pred_region
      %124 = vst [vmem:[#allocation2] sm:$0xff] 0.0
      %125 = vst [vmem:[#allocation2 + $0x8] sm:$0xf] 0.0
      %vm126 = vcmask 1024
      %127 = vst.msk [vmem:[#allocation3] sm:$0x3] %vm126, 0.0
    $region61: #{tpu_custom_call.1} parent=1 // pred_fallthru
      _
    %v128 = vld [vmem:[#allocation7] sm:$0x3]
    %v129 = vld [vmem:[#allocation4] sm:$0xff]
    %v130 = vld [vmem:[#allocation4 + $0x8] sm:$0xff]
    %v131 = vld [vmem:[#allocation4 + $0x10] sm:$0xff]
    %v132 = vld [vmem:[#allocation4 + $0x18] sm:$0xff]
    %v133 = vld [vmem:[#allocation4 + $0x20] sm:$0xff]
    %v134 = vld [vmem:[#allocation4 + $0x28] sm:$0xff]
    %v135 = vld [vmem:[#allocation2] sm:$0xff]
    %v136 = vld [vmem:[#allocation2 + $0x8] sm:$0xf]
    %v137 = vunpack.c.l.bf16 %v129
    %v138 = vunpack.c.h.bf16 %v129
    %v139 = vunpack.c.l.bf16 %v130
    %v140 = vunpack.c.h.bf16 %v130
    %v141 = vunpack.c.l.bf16 %v131
    %v142 = vunpack.c.h.bf16 %v131
    %v143 = vunpack.c.l.bf16 %v132
    %v144 = vunpack.c.h.bf16 %v132
    %v145 = vunpack.c.l.bf16 %v133
    %v146 = vunpack.c.h.bf16 %v133
    %v147 = vunpack.c.l.bf16 %v134
    %v148 = vunpack.c.h.bf16 %v134
    %v149 = vperm.slane %v128, 0
    %v150 = vlaneseq
    %v151 = vshrl.u32 %v150, 7
    %153 = vset.pattern.permute.xlu0 %v151
    %154 = vperm.xlu0 %153, %v149
    %v155 = vpop.permute.xlu0 %154
    %v156 = vperm.slane %v128, 1
    %v157 = vlaneseq
    %v158 = vshrl.u32 %v157, 7
    %160 = vset.pattern.permute.xlu0 %v158
    %161 = vperm.xlu0 %160, %v156
    %v162 = vpop.permute.xlu0 %161
    %v163 = vmul.f32 %v137, %v155
    %v164 = vmul.f32 %v138, %v155
    %v165 = vmul.f32 %v139, %v155
    %v166 = vmul.f32 %v140, %v155
    %v167 = vmul.f32 %v141, %v155
    %v168 = vmul.f32 %v142, %v155
    %v169 = vmul.f32 %v143, %v162
    %v170 = vmul.f32 %v144, %v162
    %v171 = vmul.f32 %v145, %v162
    %v172 = vmul.f32 %v146, %v162
    %v173 = vmul.f32 %v147, %v162
    %v174 = vmul.f32 %v148, %v162
    %v175 = vrot.slane %v163, 4
    %v176 = vadd.f32 %v163, %v175
    %v177 = vrot.slane %v176, 2
    %v178 = vadd.f32 %v176, %v177
    %v179 = vrot.slane %v178, 1
    %v180 = vadd.f32 %v178, %v179
    %v181 = vrot.slane %v164, 4
    %v182 = vadd.f32 %v164, %v181
    %v183 = vrot.slane %v182, 2
    %v184 = vadd.f32 %v182, %v183
    %v185 = vrot.slane %v184, 1
    %v186 = vadd.f32 %v184, %v185
    %v187 = vrot.slane %v165, 4
    %v188 = vadd.f32 %v165, %v187
    %v189 = vrot.slane %v188, 2
    %v190 = vadd.f32 %v188, %v189
    %v191 = vrot.slane %v190, 1
    %v192 = vadd.f32 %v190, %v191
    %v193 = vrot.slane %v166, 4
    %v194 = vadd.f32 %v166, %v193
    %v195 = vrot.slane %v194, 2
    %v196 = vadd.f32 %v194, %v195
    %v197 = vrot.slane %v196, 1
    %v198 = vadd.f32 %v196, %v197
    %v199 = vrot.slane %v167, 4
    %v200 = vadd.f32 %v167, %v199
    %v201 = vrot.slane %v200, 2
    %v202 = vadd.f32 %v200, %v201
    %v203 = vrot.slane %v202, 1
    %v204 = vadd.f32 %v202, %v203
    %v205 = vrot.slane %v168, 4
    %v206 = vadd.f32 %v168, %v205
    %v207 = vrot.slane %v206, 2
    %v208 = vadd.f32 %v206, %v207
    %v209 = vrot.slane %v208, 1
    %v210 = vadd.f32 %v208, %v209
    %v211 = vrot.slane %v169, 4
    %v212 = vadd.f32 %v169, %v211
    %v213 = vrot.slane %v212, 2
    %v214 = vadd.f32 %v212, %v213
    %v215 = vrot.slane %v214, 1
    %v216 = vadd.f32 %v214, %v215
    %v217 = vrot.slane %v170, 4
    %v218 = vadd.f32 %v170, %v217
    %v219 = vrot.slane %v218, 2
    %v220 = vadd.f32 %v218, %v219
    %v221 = vrot.slane %v220, 1
    %v222 = vadd.f32 %v220, %v221
    %v223 = vrot.slane %v171, 4
    %v224 = vadd.f32 %v171, %v223
    %v225 = vrot.slane %v224, 2
    %v226 = vadd.f32 %v224, %v225
    %v227 = vrot.slane %v226, 1
    %v228 = vadd.f32 %v226, %v227
    %v229 = vrot.slane %v172, 4
    %v230 = vadd.f32 %v172, %v229
    %v231 = vrot.slane %v230, 2
    %v232 = vadd.f32 %v230, %v231
    %v233 = vrot.slane %v232, 1
    %v234 = vadd.f32 %v232, %v233
    %v235 = vrot.slane %v173, 4
    %v236 = vadd.f32 %v173, %v235
    %v237 = vrot.slane %v236, 2
    %v238 = vadd.f32 %v236, %v237
    %v239 = vrot.slane %v238, 1
    %v240 = vadd.f32 %v238, %v239
    %v241 = vrot.slane %v174, 4
    %v242 = vadd.f32 %v174, %v241
    %v243 = vrot.slane %v242, 2
    %v244 = vadd.f32 %v242, %v243
    %v245 = vrot.slane %v244, 1
    %v246 = vadd.f32 %v244, %v245
    %v259 = vrot.slane %v186, 6
    %v260 = vrot.slane %v192, 4
    %v261 = vrot.slane %v198, 2
    %v262 = vrot.slane %v210, 6
    %v263 = vrot.slane %v222, 6
    %v264 = vrot.slane %v228, 4
    %v265 = vrot.slane %v234, 2
    %v266 = vrot.slane %v246, 6
    %vm267 = vcmask 1041408
    %v268 = vsel %vm267, %v180, %v259
    %vm269 = vcmask 1045508
    %v270 = vsel %vm269, %v260, %v261
    %vm271 = vcmask 1043456
    %v272 = vsel %vm271, %v268, %v270
    %v273 = vsel %vm267, %v204, %v262
    %v274 = vsel %vm267, %v216, %v263
    %v275 = vsel %vm269, %v264, %v265
    %v276 = vsel %vm271, %v274, %v275
    %v277 = vsel %vm267, %v240, %v266
    %vm278 = vcmask 1044484
    %v279 = vsel %vm278, %v272, %v272
    %vm280 = vcmask 1046534
    %v281 = vsel %vm280, %v272, %v279
    %v282 = vrot.slane %v276, 7
    %vm283 = vcmask 1041409
    %v284 = vsel %vm283, %v282, %v281
    %vm285 = vcmask 1043459
    %v286 = vsel %vm285, %v282, %v284
    %vm287 = vcmask 1045509
    %v288 = vsel %vm287, %v282, %v286
    %vm289 = vcmask 1047559
    %v290 = vsel %vm289, %v282, %v288
    %v291 = vsel %vm278, %v273, %v273
    %v292 = vsel %vm280, %v273, %v291
    %v293 = vrot.slane %v277, 7
    %v294 = vsel %vm283, %v293, %v292
    %v295 = vsel %vm285, %v293, %v294
    %v296 = vsel %vm287, %v293, %v295
    %v297 = vsel %vm289, %v293, %v296
    %v300 = vadd.f32 %v135, %v290
    %v301 = vadd.f32 %v136, %v297
    %302 = vst [vmem:[#allocation2] sm:$0xff] %v300
    %303 = vst [vmem:[#allocation2 + $0x8] sm:$0xf] %v301
    %v304 = vld [vmem:[#allocation3] sm:$0x3]
    %vm305 = vcmask 58368
    %v306 = vsel %vm305, %v128, 0.0
    %307 = vadd.xlane.f32.xlu0 %v306
    %v308 = vpop.xlane.xlu0 %307
    %v309 = vadd.f32 %v304, %v308
    %vm310 = vcmask 1024
    %311 = vst.msk [vmem:[#allocation3] sm:$0x3] %vm310, %v309
    // Predicated region
    $region62: #{tpu_custom_call.1} parent=1 // pred_check
      %p312 = pneg %p120
    $region63: #{tpu_custom_call.1} parent=1 // pred_check_branch
      %314 = sbr.rel (%p312) target = $region65
    $region64: #{tpu_custom_call.1} parent=1 // pred_region
      %v315 = vld [vmem:[#allocation3] sm:$0x3]
      %v316 = vmax.f32 %v315, 1e-09
      %v317 = vld [vmem:[#allocation2] sm:$0xff]
      %v318 = vld [vmem:[#allocation2 + $0x8] sm:$0xf]
      %320 = vset.pattern.permute.xlu0 0
      %321 = vperm.xlu0 %320, %v316
      %v322 = vpop.permute.xlu0 %321
      %v324 = vunpack.c.l.s4 269488144
      %v325 = vunpack.c.0.s8 %v324
      %v326 = vperm.slane %v322, %v325
      %v328 = vrcp.pop %v326
      %v329 = vmul.f32 %v326, %v328
      %v330 = vsub.f32 1.0, %v329
      %v331 = vmul.f32 %v328, %v330
      %v332 = vadd.f32 %v328, %v331
      %vm333 = vweird.f32 %v326
      %vm334 = vweird.f32 %v328
      %vm335 = vmor %vm333, %vm334
      %v336 = vsel %vm335, %v328, %v332
      %v337 = vand.u32 2147483647, %v326
      %vm338 = vcmp.eq.f32.partialorder %v337, 8.507059e+37
      %v339 = vand.u32 %v326, 2147483648
      %v340 = vor.u32 1.1754944e-38, %v339
      %v341 = vsel %vm338, %v340, %v336
      %v342 = vmul.f32 %v317, %v341
      %v343 = vmul.f32 %v318, %v341
      %346 = vst [vmem:[#allocation1] ss:$4 sm:$0xff] %v342
      %s347 = scalar_lea.vmem [#allocation1], 32
      %348 = vst [vmem:[%s347] ss:$4 sm:$0xff] %v343
      %v349 = vld.sshfl [vmem:[#allocation1] sm:$0xff pattern:$0x73625140]
      %v350 = vld.sshfl [vmem:[#allocation1 + $0x8] sm:$0xff pattern:$0x73625140]
      %v351 = vld.sshfl [vmem:[#allocation1 + $0x10] sm:$0xff pattern:$0x73625140]
      %v352 = vld.sshfl [vmem:[#allocation1 + $0x18] sm:$0xff pattern:$0x73625140]
      %v353 = vld.sshfl [vmem:[#allocation1 + $0x20] sm:$0xff pattern:$0x73625140]
      %v354 = vld.sshfl [vmem:[#allocation1 + $0x28] sm:$0xff pattern:$0x73625140]
      %v361 = vpack.c.bf16 %v349, %v349
      %v362 = vpack.c.bf16 %v350, %v350
      %v363 = vpack.c.bf16 %v351, %v351
      %v364 = vpack.c.bf16 %v352, %v352
      %v365 = vpack.c.bf16 %v353, %v353
      %v366 = vpack.c.bf16 %v354, %v354
      %v367 = vld [vmem:[#allocation10] sm:$0xff]
      %v368 = vld [vmem:[#allocation10 + $0x8] sm:$0xff]
      %v369 = vld [vmem:[#allocation10 + $0x10] sm:$0xff]
      %v370 = vld [vmem:[#allocation10 + $0x18] sm:$0xff]
      %v371 = vld [vmem:[#allocation10 + $0x20] sm:$0xff]
      %v372 = vld [vmem:[#allocation10 + $0x28] sm:$0xff]
      %v373 = vld [vmem:[#allocation10 + $0x30] sm:$0xff]
      %v374 = vld [vmem:[#allocation10 + $0x38] sm:$0xff]
      %v375 = vld [vmem:[#allocation10 + $0x40] sm:$0xff]
      %v376 = vld [vmem:[#allocation10 + $0x48] sm:$0xff]
      %v377 = vld [vmem:[#allocation10 + $0x50] sm:$0xff]
      %v378 = vld [vmem:[#allocation10 + $0x58] sm:$0xff]
      %v379 = vld [vmem:[#allocation10 + $0x60] sm:$0xff]
      %v380 = vld [vmem:[#allocation10 + $0x68] sm:$0xff]
      %v381 = vld [vmem:[#allocation10 + $0x70] sm:$0xff]
      %v382 = vld [vmem:[#allocation10 + $0x78] sm:$0xff]
      %v383 = vld [vmem:[#allocation10 + $0x80] sm:$0xff]
      %v384 = vld [vmem:[#allocation10 + $0x88] sm:$0xff]
      %v385 = vld [vmem:[#allocation10 + $0x90] sm:$0xff]
      %v386 = vld [vmem:[#allocation10 + $0x98] sm:$0xff]
      %v387 = vld [vmem:[#allocation10 + $0xa0] sm:$0xff]
      %v388 = vld [vmem:[#allocation10 + $0xa8] sm:$0xff]
      %v389 = vld [vmem:[#allocation10 + $0xb0] sm:$0xff]
      %v390 = vld [vmem:[#allocation10 + $0xb8] sm:$0xff]
      %v391 = vld [vmem:[#allocation10 + $0xc0] sm:$0xff]
      %v392 = vld [vmem:[#allocation10 + $0xc8] sm:$0xff]
      %v393 = vld [vmem:[#allocation10 + $0xd0] sm:$0xff]
      %v394 = vld [vmem:[#allocation10 + $0xd8] sm:$0xff]
      %v395 = vld [vmem:[#allocation10 + $0xe0] sm:$0xff]
      %v396 = vld [vmem:[#allocation10 + $0xe8] sm:$0xff]
      %v397 = vld [vmem:[#allocation10 + $0xf0] sm:$0xff]
      %v398 = vld [vmem:[#allocation10 + $0xf8] sm:$0xff]
      %v399 = vld [vmem:[#allocation10 + $0x100] sm:$0xff]
      %v400 = vld [vmem:[#allocation10 + $0x108] sm:$0xff]
      %v401 = vld [vmem:[#allocation10 + $0x110] sm:$0xff]
      %v402 = vld [vmem:[#allocation10 + $0x118] sm:$0xff]
      %v403 = vld [vmem:[#allocation10 + $0x120] sm:$0xff]
      %v404 = vld [vmem:[#allocation10 + $0x128] sm:$0xff]
      %v405 = vld [vmem:[#allocation10 + $0x130] sm:$0xff]
      %v406 = vld [vmem:[#allocation10 + $0x138] sm:$0xff]
      %v407 = vld [vmem:[#allocation10 + $0x140] sm:$0xff]
      %v408 = vld [vmem:[#allocation10 + $0x148] sm:$0xff]
      %v409 = vld [vmem:[#allocation10 + $0x150] sm:$0xff]
      %v410 = vld [vmem:[#allocation10 + $0x158] sm:$0xff]
      %v411 = vld [vmem:[#allocation10 + $0x160] sm:$0xff]
      %v412 = vld [vmem:[#allocation10 + $0x168] sm:$0xff]
      %v413 = vld [vmem:[#allocation10 + $0x170] sm:$0xff]
      %v414 = vld [vmem:[#allocation10 + $0x178] sm:$0xff]
      %v415 = vld [vmem:[#allocation10 + $0x180] sm:$0xff]
      %v416 = vld [vmem:[#allocation10 + $0x188] sm:$0xff]
      %v417 = vld [vmem:[#allocation10 + $0x190] sm:$0xff]
      %v418 = vld [vmem:[#allocation10 + $0x198] sm:$0xff]
      %v419 = vld [vmem:[#allocation10 + $0x1a0] sm:$0xff]
      %v420 = vld [vmem:[#allocation10 + $0x1a8] sm:$0xff]
      %v421 = vld [vmem:[#allocation10 + $0x1b0] sm:$0xff]
      %v422 = vld [vmem:[#allocation10 + $0x1b8] sm:$0xff]
      %v423 = vld [vmem:[#allocation10 + $0x1c0] sm:$0xff]
      %v424 = vld [vmem:[#allocation10 + $0x1c8] sm:$0xff]
      %v425 = vld [vmem:[#allocation10 + $0x1d0] sm:$0xff]
      %v426 = vld [vmem:[#allocation10 + $0x1d8] sm:$0xff]
      %v427 = vld [vmem:[#allocation10 + $0x1e0] sm:$0xff]
      %v428 = vld [vmem:[#allocation10 + $0x1e8] sm:$0xff]
      %v429 = vld [vmem:[#allocation10 + $0x1f0] sm:$0xff]
      %v430 = vld [vmem:[#allocation10 + $0x1f8] sm:$0xff]
      %v431 = vld [vmem:[#allocation10 + $0x200] sm:$0xff]
      %v432 = vld [vmem:[#allocation10 + $0x208] sm:$0xff]
      %v433 = vld [vmem:[#allocation10 + $0x210] sm:$0xff]
      %v434 = vld [vmem:[#allocation10 + $0x218] sm:$0xff]
      %v435 = vld [vmem:[#allocation10 + $0x220] sm:$0xff]
      %v436 = vld [vmem:[#allocation10 + $0x228] sm:$0xff]
      %v437 = vld [vmem:[#allocation10 + $0x230] sm:$0xff]
      %v438 = vld [vmem:[#allocation10 + $0x238] sm:$0xff]
      %v439 = vld [vmem:[#allocation10 + $0x240] sm:$0xff]
      %v440 = vld [vmem:[#allocation10 + $0x248] sm:$0xff]
      %v441 = vld [vmem:[#allocation10 + $0x250] sm:$0xff]
      %v442 = vld [vmem:[#allocation10 + $0x258] sm:$0xff]
      %v443 = vld [vmem:[#allocation10 + $0x260] sm:$0xff]
      %v444 = vld [vmem:[#allocation10 + $0x268] sm:$0xff]
      %v445 = vld [vmem:[#allocation10 + $0x270] sm:$0xff]
      %v446 = vld [vmem:[#allocation10 + $0x278] sm:$0xff]
      %v447 = vld [vmem:[#allocation10 + $0x280] sm:$0xff]
      %v448 = vld [vmem:[#allocation10 + $0x288] sm:$0xff]
      %v449 = vld [vmem:[#allocation10 + $0x290] sm:$0xff]
      %v450 = vld [vmem:[#allocation10 + $0x298] sm:$0xff]
      %v451 = vld [vmem:[#allocation10 + $0x2a0] sm:$0xff]
      %v452 = vld [vmem:[#allocation10 + $0x2a8] sm:$0xff]
      %v453 = vld [vmem:[#allocation10 + $0x2b0] sm:$0xff]
      %v454 = vld [vmem:[#allocation10 + $0x2b8] sm:$0xff]
      %v455 = vld [vmem:[#allocation10 + $0x2c0] sm:$0xff]
      %v456 = vld [vmem:[#allocation10 + $0x2c8] sm:$0xff]
      %v457 = vld [vmem:[#allocation10 + $0x2d0] sm:$0xff]
      %v458 = vld [vmem:[#allocation10 + $0x2d8] sm:$0xff]
      %v459 = vld [vmem:[#allocation10 + $0x2e0] sm:$0xff]
      %v460 = vld [vmem:[#allocation10 + $0x2e8] sm:$0xff]
      %v461 = vld [vmem:[#allocation10 + $0x2f0] sm:$0xff]
      %v462 = vld [vmem:[#allocation10 + $0x2f8] sm:$0xff]
      %v463 = vld [vmem:[#allocation10 + $0x300] sm:$0xff]
      %v464 = vld [vmem:[#allocation10 + $0x308] sm:$0xff]
      %v465 = vld [vmem:[#allocation10 + $0x310] sm:$0xff]
      %v466 = vld [vmem:[#allocation10 + $0x318] sm:$0xff]
      %v467 = vld [vmem:[#allocation10 + $0x320] sm:$0xff]
      %v468 = vld [vmem:[#allocation10 + $0x328] sm:$0xff]
      %v469 = vld [vmem:[#allocation10 + $0x330] sm:$0xff]
      %v470 = vld [vmem:[#allocation10 + $0x338] sm:$0xff]
      %v471 = vld [vmem:[#allocation10 + $0x340] sm:$0xff]
      %v472 = vld [vmem:[#allocation10 + $0x348] sm:$0xff]
      %v473 = vld [vmem:[#allocation10 + $0x350] sm:$0xff]
      %v474 = vld [vmem:[#allocation10 + $0x358] sm:$0xff]
      %v475 = vld [vmem:[#allocation10 + $0x360] sm:$0xff]
      %v476 = vld [vmem:[#allocation10 + $0x368] sm:$0xff]
      %v477 = vld [vmem:[#allocation10 + $0x370] sm:$0xff]
      %v478 = vld [vmem:[#allocation10 + $0x378] sm:$0xff]
      %v479 = vld [vmem:[#allocation10 + $0x380] sm:$0xff]
      %v480 = vld [vmem:[#allocation10 + $0x388] sm:$0xff]
      %v481 = vld [vmem:[#allocation10 + $0x390] sm:$0xff]
      %v482 = vld [vmem:[#allocation10 + $0x398] sm:$0xff]
      %v483 = vld [vmem:[#allocation10 + $0x3a0] sm:$0xff]
      %v484 = vld [vmem:[#allocation10 + $0x3a8] sm:$0xff]
      %v485 = vld [vmem:[#allocation10 + $0x3b0] sm:$0xff]
      %v486 = vld [vmem:[#allocation10 + $0x3b8] sm:$0xff]
      %v487 = vld [vmem:[#allocation10 + $0x3c0] sm:$0xff]
      %v488 = vld [vmem:[#allocation10 + $0x3c8] sm:$0xff]
      %v489 = vld [vmem:[#allocation10 + $0x3d0] sm:$0xff]
      %v490 = vld [vmem:[#allocation10 + $0x3d8] sm:$0xff]
      %v491 = vld [vmem:[#allocation10 + $0x3e0] sm:$0xff]
      %v492 = vld [vmem:[#allocation10 + $0x3e8] sm:$0xff]
      %v493 = vld [vmem:[#allocation10 + $0x3f0] sm:$0xff]
      %v494 = vld [vmem:[#allocation10 + $0x3f8] sm:$0xff]
      %v495 = vld [vmem:[#allocation10 + $0x400] sm:$0xff]
      %v496 = vld [vmem:[#allocation10 + $0x408] sm:$0xff]
      %v497 = vld [vmem:[#allocation10 + $0x410] sm:$0xff]
      %v498 = vld [vmem:[#allocation10 + $0x418] sm:$0xff]
      %v499 = vld [vmem:[#allocation10 + $0x420] sm:$0xff]
      %v500 = vld [vmem:[#allocation10 + $0x428] sm:$0xff]
      %v501 = vld [vmem:[#allocation10 + $0x430] sm:$0xff]
      %v502 = vld [vmem:[#allocation10 + $0x438] sm:$0xff]
      %v503 = vld [vmem:[#allocation10 + $0x440] sm:$0xff]
      %v504 = vld [vmem:[#allocation10 + $0x448] sm:$0xff]
      %v505 = vld [vmem:[#allocation10 + $0x450] sm:$0xff]
      %v506 = vld [vmem:[#allocation10 + $0x458] sm:$0xff]
      %v507 = vld [vmem:[#allocation10 + $0x460] sm:$0xff]
      %v508 = vld [vmem:[#allocation10 + $0x468] sm:$0xff]
      %v509 = vld [vmem:[#allocation10 + $0x470] sm:$0xff]
      %v510 = vld [vmem:[#allocation10 + $0x478] sm:$0xff]
      %v511 = vld [vmem:[#allocation10 + $0x480] sm:$0xff]
      %v512 = vld [vmem:[#allocation10 + $0x488] sm:$0xff]
      %v513 = vld [vmem:[#allocation10 + $0x490] sm:$0xff]
      %v514 = vld [vmem:[#allocation10 + $0x498] sm:$0xff]
      %v515 = vld [vmem:[#allocation10 + $0x4a0] sm:$0xff]
      %v516 = vld [vmem:[#allocation10 + $0x4a8] sm:$0xff]
      %v517 = vld [vmem:[#allocation10 + $0x4b0] sm:$0xff]
      %v518 = vld [vmem:[#allocation10 + $0x4b8] sm:$0xff]
      %v519 = vld [vmem:[#allocation10 + $0x4c0] sm:$0xff]
      %v520 = vld [vmem:[#allocation10 + $0x4c8] sm:$0xff]
      %v521 = vld [vmem:[#allocation10 + $0x4d0] sm:$0xff]
      %v522 = vld [vmem:[#allocation10 + $0x4d8] sm:$0xff]
      %v523 = vld [vmem:[#allocation10 + $0x4e0] sm:$0xff]
      %v524 = vld [vmem:[#allocation10 + $0x4e8] sm:$0xff]
      %v525 = vld [vmem:[#allocation10 + $0x4f0] sm:$0xff]
      %v526 = vld [vmem:[#allocation10 + $0x4f8] sm:$0xff]
      %v527 = vld [vmem:[#allocation10 + $0x500] sm:$0xff]
      %v528 = vld [vmem:[#allocation10 + $0x508] sm:$0xff]
      %v529 = vld [vmem:[#allocation10 + $0x510] sm:$0xff]
      %v530 = vld [vmem:[#allocation10 + $0x518] sm:$0xff]
      %v531 = vld [vmem:[#allocation10 + $0x520] sm:$0xff]
      %v532 = vld [vmem:[#allocation10 + $0x528] sm:$0xff]
      %v533 = vld [vmem:[#allocation10 + $0x530] sm:$0xff]
      %v534 = vld [vmem:[#allocation10 + $0x538] sm:$0xff]
      %v535 = vld [vmem:[#allocation10 + $0x540] sm:$0xff]
      %v536 = vld [vmem:[#allocation10 + $0x548] sm:$0xff]
      %v537 = vld [vmem:[#allocation10 + $0x550] sm:$0xff]
      %v538 = vld [vmem:[#allocation10 + $0x558] sm:$0xff]
      %v539 = vld [vmem:[#allocation10 + $0x560] sm:$0xff]
      %v540 = vld [vmem:[#allocation10 + $0x568] sm:$0xff]
      %v541 = vld [vmem:[#allocation10 + $0x570] sm:$0xff]
      %v542 = vld [vmem:[#allocation10 + $0x578] sm:$0xff]
      %v543 = vld [vmem:[#allocation10 + $0x580] sm:$0xff]
      %v544 = vld [vmem:[#allocation10 + $0x588] sm:$0xff]
      %v545 = vld [vmem:[#allocation10 + $0x590] sm:$0xff]
      %v546 = vld [vmem:[#allocation10 + $0x598] sm:$0xff]
      %v547 = vld [vmem:[#allocation10 + $0x5a0] sm:$0xff]
      %v548 = vld [vmem:[#allocation10 + $0x5a8] sm:$0xff]
      %v549 = vld [vmem:[#allocation10 + $0x5b0] sm:$0xff]
      %v550 = vld [vmem:[#allocation10 + $0x5b8] sm:$0xff]
      %v551 = vld [vmem:[#allocation10 + $0x5c0] sm:$0xff]
      %v552 = vld [vmem:[#allocation10 + $0x5c8] sm:$0xff]
      %v553 = vld [vmem:[#allocation10 + $0x5d0] sm:$0xff]
      %v554 = vld [vmem:[#allocation10 + $0x5d8] sm:$0xff]
      %v555 = vld [vmem:[#allocation10 + $0x5e0] sm:$0xff]
      %v556 = vld [vmem:[#allocation10 + $0x5e8] sm:$0xff]
      %v557 = vld [vmem:[#allocation10 + $0x5f0] sm:$0xff]
      %v558 = vld [vmem:[#allocation10 + $0x5f8] sm:$0xff]
      %v559 = vld [vmem:[#allocation9] sm:$0xff]
      %v752 = vunpack.c.l.b16 %v367
      %v753 = vunpack.c.h.b16 %v367
      %v754 = vunpack.c.l.b16 %v368
      %v755 = vunpack.c.h.b16 %v368
      %v756 = vunpack.c.l.b16 %v369
      %v757 = vunpack.c.h.b16 %v369
      %v758 = vunpack.c.l.b16 %v370
      %v759 = vunpack.c.h.b16 %v370
      %v760 = vunpack.c.l.b16 %v371
      %v761 = vunpack.c.h.b16 %v371
      %v762 = vunpack.c.l.b16 %v372
      %v763 = vunpack.c.h.b16 %v372
      %v764 = vunpack.c.l.b16 %v373
      %v765 = vunpack.c.h.b16 %v373
      %v766 = vunpack.c.l.b16 %v374
      %v767 = vunpack.c.h.b16 %v374
      %v768 = vunpack.c.l.b16 %v375
      %v769 = vunpack.c.h.b16 %v375
      %v770 = vunpack.c.l.b16 %v376
      %v771 = vunpack.c.h.b16 %v376
      %v772 = vunpack.c.l.b16 %v377
      %v773 = vunpack.c.h.b16 %v377
      %v774 = vunpack.c.l.b16 %v378
      %v775 = vunpack.c.h.b16 %v378
      %v776 = vunpack.c.l.b16 %v379
      %v777 = vunpack.c.h.b16 %v379
      %v778 = vunpack.c.l.b16 %v380
      %v779 = vunpack.c.h.b16 %v380
      %v780 = vunpack.c.l.b16 %v381
      %v781 = vunpack.c.h.b16 %v381
      %v782 = vunpack.c.l.b16 %v382
      %v783 = vunpack.c.h.b16 %v382
      %v784 = vunpack.c.l.b16 %v383
      %v785 = vunpack.c.h.b16 %v383
      %v786 = vunpack.c.l.b16 %v384
      %v787 = vunpack.c.h.b16 %v384
      %v788 = vunpack.c.l.b16 %v385
      %v789 = vunpack.c.h.b16 %v385
      %v790 = vunpack.c.l.b16 %v386
      %v791 = vunpack.c.h.b16 %v386
      %v792 = vunpack.c.l.b16 %v387
      %v793 = vunpack.c.h.b16 %v387
      %v794 = vunpack.c.l.b16 %v388
      %v795 = vunpack.c.h.b16 %v388
      %v796 = vunpack.c.l.b16 %v389
      %v797 = vunpack.c.h.b16 %v389
      %v798 = vunpack.c.l.b16 %v390
      %v799 = vunpack.c.h.b16 %v390
      %v800 = vunpack.c.l.b16 %v391
      %v801 = vunpack.c.h.b16 %v391
      %v802 = vunpack.c.l.b16 %v392
      %v803 = vunpack.c.h.b16 %v392
      %v804 = vunpack.c.l.b16 %v393
      %v805 = vunpack.c.h.b16 %v393
      %v806 = vunpack.c.l.b16 %v394
      %v807 = vunpack.c.h.b16 %v394
      %v808 = vunpack.c.l.b16 %v395
      %v809 = vunpack.c.h.b16 %v395
      %v810 = vunpack.c.l.b16 %v396
      %v811 = vunpack.c.h.b16 %v396
      %v812 = vunpack.c.l.b16 %v397
      %v813 = vunpack.c.h.b16 %v397
      %v814 = vunpack.c.l.b16 %v398
      %v815 = vunpack.c.h.b16 %v398
      %v816 = vunpack.c.l.b16 %v399
      %v817 = vunpack.c.h.b16 %v399
      %v818 = vunpack.c.l.b16 %v400
      %v819 = vunpack.c.h.b16 %v400
      %v820 = vunpack.c.l.b16 %v401
      %v821 = vunpack.c.h.b16 %v401
      %v822 = vunpack.c.l.b16 %v402
      %v823 = vunpack.c.h.b16 %v402
      %v824 = vunpack.c.l.b16 %v403
      %v825 = vunpack.c.h.b16 %v403
      %v826 = vunpack.c.l.b16 %v404
      %v827 = vunpack.c.h.b16 %v404
      %v828 = vunpack.c.l.b16 %v405
      %v829 = vunpack.c.h.b16 %v405
      %v830 = vunpack.c.l.b16 %v406
      %v831 = vunpack.c.h.b16 %v406
      %v832 = vunpack.c.l.b16 %v407
      %v833 = vunpack.c.h.b16 %v407
      %v834 = vunpack.c.l.b16 %v408
      %v835 = vunpack.c.h.b16 %v408
      %v836 = vunpack.c.l.b16 %v409
      %v837 = vunpack.c.h.b16 %v409
      %v838 = vunpack.c.l.b16 %v410
      %v839 = vunpack.c.h.b16 %v410
      %v840 = vunpack.c.l.b16 %v411
      %v841 = vunpack.c.h.b16 %v411
      %v842 = vunpack.c.l.b16 %v412
      %v843 = vunpack.c.h.b16 %v412
      %v844 = vunpack.c.l.b16 %v413
      %v845 = vunpack.c.h.b16 %v413
      %v846 = vunpack.c.l.b16 %v414
      %v847 = vunpack.c.h.b16 %v414
      %v848 = vunpack.c.l.b16 %v415
      %v849 = vunpack.c.h.b16 %v415
      %v850 = vunpack.c.l.b16 %v416
      %v851 = vunpack.c.h.b16 %v416
      %v852 = vunpack.c.l.b16 %v417
      %v853 = vunpack.c.h.b16 %v417
      %v854 = vunpack.c.l.b16 %v418
      %v855 = vunpack.c.h.b16 %v418
      %v856 = vunpack.c.l.b16 %v419
      %v857 = vunpack.c.h.b16 %v419
      %v858 = vunpack.c.l.b16 %v420
      %v859 = vunpack.c.h.b16 %v420
      %v860 = vunpack.c.l.b16 %v421
      %v861 = vunpack.c.h.b16 %v421
      %v862 = vunpack.c.l.b16 %v422
      %v863 = vunpack.c.h.b16 %v422
      %v864 = vunpack.c.l.b16 %v423
      %v865 = vunpack.c.h.b16 %v423
      %v866 = vunpack.c.l.b16 %v424
      %v867 = vunpack.c.h.b16 %v424
      %v868 = vunpack.c.l.b16 %v425
      %v869 = vunpack.c.h.b16 %v425
      %v870 = vunpack.c.l.b16 %v426
      %v871 = vunpack.c.h.b16 %v426
      %v872 = vunpack.c.l.b16 %v427
      %v873 = vunpack.c.h.b16 %v427
      %v874 = vunpack.c.l.b16 %v428
      %v875 = vunpack.c.h.b16 %v428
      %v876 = vunpack.c.l.b16 %v429
      %v877 = vunpack.c.h.b16 %v429
      %v878 = vunpack.c.l.b16 %v430
      %v879 = vunpack.c.h.b16 %v430
      %v880 = vunpack.c.l.b16 %v431
      %v881 = vunpack.c.h.b16 %v431
      %v882 = vunpack.c.l.b16 %v432
      %v883 = vunpack.c.h.b16 %v432
      %v884 = vunpack.c.l.b16 %v433
      %v885 = vunpack.c.h.b16 %v433
      %v886 = vunpack.c.l.b16 %v434
      %v887 = vunpack.c.h.b16 %v434
      %v888 = vunpack.c.l.b16 %v435
      %v889 = vunpack.c.h.b16 %v435
      %v890 = vunpack.c.l.b16 %v436
      %v891 = vunpack.c.h.b16 %v436
      %v892 = vunpack.c.l.b16 %v437
      %v893 = vunpack.c.h.b16 %v437
      %v894 = vunpack.c.l.b16 %v438
      %v895 = vunpack.c.h.b16 %v438
      %v896 = vunpack.c.l.b16 %v439
      %v897 = vunpack.c.h.b16 %v439
      %v898 = vunpack.c.l.b16 %v440
      %v899 = vunpack.c.h.b16 %v440
      %v900 = vunpack.c.l.b16 %v441
      %v901 = vunpack.c.h.b16 %v441
      %v902 = vunpack.c.l.b16 %v442
      %v903 = vunpack.c.h.b16 %v442
      %v904 = vunpack.c.l.b16 %v443
      %v905 = vunpack.c.h.b16 %v443
      %v906 = vunpack.c.l.b16 %v444
      %v907 = vunpack.c.h.b16 %v444
      %v908 = vunpack.c.l.b16 %v445
      %v909 = vunpack.c.h.b16 %v445
      %v910 = vunpack.c.l.b16 %v446
      %v911 = vunpack.c.h.b16 %v446
      %v912 = vunpack.c.l.b16 %v447
      %v913 = vunpack.c.h.b16 %v447
      %v914 = vunpack.c.l.b16 %v448
      %v915 = vunpack.c.h.b16 %v448
      %v916 = vunpack.c.l.b16 %v449
      %v917 = vunpack.c.h.b16 %v449
      %v918 = vunpack.c.l.b16 %v450
      %v919 = vunpack.c.h.b16 %v450
      %v920 = vunpack.c.l.b16 %v451
      %v921 = vunpack.c.h.b16 %v451
      %v922 = vunpack.c.l.b16 %v452
      %v923 = vunpack.c.h.b16 %v452
      %v924 = vunpack.c.l.b16 %v453
      %v925 = vunpack.c.h.b16 %v453
      %v926 = vunpack.c.l.b16 %v454
      %v927 = vunpack.c.h.b16 %v454
      %v928 = vunpack.c.l.b16 %v455
      %v929 = vunpack.c.h.b16 %v455
      %v930 = vunpack.c.l.b16 %v456
      %v931 = vunpack.c.h.b16 %v456
      %v932 = vunpack.c.l.b16 %v457
      %v933 = vunpack.c.h.b16 %v457
      %v934 = vunpack.c.l.b16 %v458
      %v935 = vunpack.c.h.b16 %v458
      %v936 = vunpack.c.l.b16 %v459
      %v937 = vunpack.c.h.b16 %v459
      %v938 = vunpack.c.l.b16 %v460
      %v939 = vunpack.c.h.b16 %v460
      %v940 = vunpack.c.l.b16 %v461
      %v941 = vunpack.c.h.b16 %v461
      %v942 = vunpack.c.l.b16 %v462
      %v943 = vunpack.c.h.b16 %v462
      %v944 = vunpack.c.l.b16 %v463
      %v945 = vunpack.c.h.b16 %v463
      %v946 = vunpack.c.l.b16 %v464
      %v947 = vunpack.c.h.b16 %v464
      %v948 = vunpack.c.l.b16 %v465
      %v949 = vunpack.c.h.b16 %v465
      %v950 = vunpack.c.l.b16 %v466
      %v951 = vunpack.c.h.b16 %v466
      %v952 = vunpack.c.l.b16 %v467
      %v953 = vunpack.c.h.b16 %v467
      %v954 = vunpack.c.l.b16 %v468
      %v955 = vunpack.c.h.b16 %v468
      %v956 = vunpack.c.l.b16 %v469
      %v957 = vunpack.c.h.b16 %v469
      %v958 = vunpack.c.l.b16 %v470
      %v959 = vunpack.c.h.b16 %v470
      %v960 = vunpack.c.l.b16 %v471
      %v961 = vunpack.c.h.b16 %v471
      %v962 = vunpack.c.l.b16 %v472
      %v963 = vunpack.c.h.b16 %v472
      %v964 = vunpack.c.l.b16 %v473
      %v965 = vunpack.c.h.b16 %v473
      %v966 = vunpack.c.l.b16 %v474
      %v967 = vunpack.c.h.b16 %v474
      %v968 = vunpack.c.l.b16 %v475
      %v969 = vunpack.c.h.b16 %v475
      %v970 = vunpack.c.l.b16 %v476
      %v971 = vunpack.c.h.b16 %v476
      %v972 = vunpack.c.l.b16 %v477
      %v973 = vunpack.c.h.b16 %v477
      %v974 = vunpack.c.l.b16 %v478
      %v975 = vunpack.c.h.b16 %v478
      %v976 = vunpack.c.l.b16 %v479
      %v977 = vunpack.c.h.b16 %v479
      %v978 = vunpack.c.l.b16 %v480
      %v979 = vunpack.c.h.b16 %v480
      %v980 = vunpack.c.l.b16 %v481
      %v981 = vunpack.c.h.b16 %v481
      %v982 = vunpack.c.l.b16 %v482
      %v983 = vunpack.c.h.b16 %v482
      %v984 = vunpack.c.l.b16 %v483
      %v985 = vunpack.c.h.b16 %v483
      %v986 = vunpack.c.l.b16 %v484
      %v987 = vunpack.c.h.b16 %v484
      %v988 = vunpack.c.l.b16 %v485
      %v989 = vunpack.c.h.b16 %v485
      %v990 = vunpack.c.l.b16 %v486
      %v991 = vunpack.c.h.b16 %v486
      %v992 = vunpack.c.l.b16 %v487
      %v993 = vunpack.c.h.b16 %v487
      %v994 = vunpack.c.l.b16 %v488
      %v995 = vunpack.c.h.b16 %v488
      %v996 = vunpack.c.l.b16 %v489
      %v997 = vunpack.c.h.b16 %v489
      %v998 = vunpack.c.l.b16 %v490
      %v999 = vunpack.c.h.b16 %v490
      %v1000 = vunpack.c.l.b16 %v491
      %v1001 = vunpack.c.h.b16 %v491
      %v1002 = vunpack.c.l.b16 %v492
      %v1003 = vunpack.c.h.b16 %v492
      %v1004 = vunpack.c.l.b16 %v493
      %v1005 = vunpack.c.h.b16 %v493
      %v1006 = vunpack.c.l.b16 %v494
      %v1007 = vunpack.c.h.b16 %v494
      %v1008 = vunpack.c.l.b16 %v495
      %v1009 = vunpack.c.h.b16 %v495
      %v1010 = vunpack.c.l.b16 %v496
      %v1011 = vunpack.c.h.b16 %v496
      %v1012 = vunpack.c.l.b16 %v497
      %v1013 = vunpack.c.h.b16 %v497
      %v1014 = vunpack.c.l.b16 %v498
      %v1015 = vunpack.c.h.b16 %v498
      %v1016 = vunpack.c.l.b16 %v499
      %v1017 = vunpack.c.h.b16 %v499
      %v1018 = vunpack.c.l.b16 %v500
      %v1019 = vunpack.c.h.b16 %v500
      %v1020 = vunpack.c.l.b16 %v501
      %v1021 = vunpack.c.h.b16 %v501
      %v1022 = vunpack.c.l.b16 %v502
      %v1023 = vunpack.c.h.b16 %v502
      %v1024 = vunpack.c.l.b16 %v503
      %v1025 = vunpack.c.h.b16 %v503
      %v1026 = vunpack.c.l.b16 %v504
      %v1027 = vunpack.c.h.b16 %v504
      %v1028 = vunpack.c.l.b16 %v505
      %v1029 = vunpack.c.h.b16 %v505
      %v1030 = vunpack.c.l.b16 %v506
      %v1031 = vunpack.c.h.b16 %v506
      %v1032 = vunpack.c.l.b16 %v507
      %v1033 = vunpack.c.h.b16 %v507
      %v1034 = vunpack.c.l.b16 %v508
      %v1035 = vunpack.c.h.b16 %v508
      %v1036 = vunpack.c.l.b16 %v509
      %v1037 = vunpack.c.h.b16 %v509
      %v1038 = vunpack.c.l.b16 %v510
      %v1039 = vunpack.c.h.b16 %v510
      %v1040 = vunpack.c.l.b16 %v511
      %v1041 = vunpack.c.h.b16 %v511
      %v1042 = vunpack.c.l.b16 %v512
      %v1043 = vunpack.c.h.b16 %v512
      %v1044 = vunpack.c.l.b16 %v513
      %v1045 = vunpack.c.h.b16 %v513
      %v1046 = vunpack.c.l.b16 %v514
      %v1047 = vunpack.c.h.b16 %v514
      %v1048 = vunpack.c.l.b16 %v515
      %v1049 = vunpack.c.h.b16 %v515
      %v1050 = vunpack.c.l.b16 %v516
      %v1051 = vunpack.c.h.b16 %v516
      %v1052 = vunpack.c.l.b16 %v517
      %v1053 = vunpack.c.h.b16 %v517
      %v1054 = vunpack.c.l.b16 %v518
      %v1055 = vunpack.c.h.b16 %v518
      %v1056 = vunpack.c.l.b16 %v519
      %v1057 = vunpack.c.h.b16 %v519
      %v1058 = vunpack.c.l.b16 %v520
      %v1059 = vunpack.c.h.b16 %v520
      %v1060 = vunpack.c.l.b16 %v521
      %v1061 = vunpack.c.h.b16 %v521
      %v1062 = vunpack.c.l.b16 %v522
      %v1063 = vunpack.c.h.b16 %v522
      %v1064 = vunpack.c.l.b16 %v523
      %v1065 = vunpack.c.h.b16 %v523
      %v1066 = vunpack.c.l.b16 %v524
      %v1067 = vunpack.c.h.b16 %v524
      %v1068 = vunpack.c.l.b16 %v525
      %v1069 = vunpack.c.h.b16 %v525
      %v1070 = vunpack.c.l.b16 %v526
      %v1071 = vunpack.c.h.b16 %v526
      %v1072 = vunpack.c.l.b16 %v527
      %v1073 = vunpack.c.h.b16 %v527
      %v1074 = vunpack.c.l.b16 %v528
      %v1075 = vunpack.c.h.b16 %v528
      %v1076 = vunpack.c.l.b16 %v529
      %v1077 = vunpack.c.h.b16 %v529
      %v1078 = vunpack.c.l.b16 %v530
      %v1079 = vunpack.c.h.b16 %v530
      %v1080 = vunpack.c.l.b16 %v531
      %v1081 = vunpack.c.h.b16 %v531
      %v1082 = vunpack.c.l.b16 %v532
      %v1083 = vunpack.c.h.b16 %v532
      %v1084 = vunpack.c.l.b16 %v533
      %v1085 = vunpack.c.h.b16 %v533
      %v1086 = vunpack.c.l.b16 %v534
      %v1087 = vunpack.c.h.b16 %v534
      %v1088 = vunpack.c.l.b16 %v535
      %v1089 = vunpack.c.h.b16 %v535
      %v1090 = vunpack.c.l.b16 %v536
      %v1091 = vunpack.c.h.b16 %v536
      %v1092 = vunpack.c.l.b16 %v537
      %v1093 = vunpack.c.h.b16 %v537
      %v1094 = vunpack.c.l.b16 %v538
      %v1095 = vunpack.c.h.b16 %v538
      %v1096 = vunpack.c.l.b16 %v539
      %v1097 = vunpack.c.h.b16 %v539
      %v1098 = vunpack.c.l.b16 %v540
      %v1099 = vunpack.c.h.b16 %v540
      %v1100 = vunpack.c.l.b16 %v541
      %v1101 = vunpack.c.h.b16 %v541
      %v1102 = vunpack.c.l.b16 %v542
      %v1103 = vunpack.c.h.b16 %v542
      %v1104 = vunpack.c.l.b16 %v543
      %v1105 = vunpack.c.h.b16 %v543
      %v1106 = vunpack.c.l.b16 %v544
      %v1107 = vunpack.c.h.b16 %v544
      %v1108 = vunpack.c.l.b16 %v545
      %v1109 = vunpack.c.h.b16 %v545
      %v1110 = vunpack.c.l.b16 %v546
      %v1111 = vunpack.c.h.b16 %v546
      %v1112 = vunpack.c.l.b16 %v547
      %v1113 = vunpack.c.h.b16 %v547
      %v1114 = vunpack.c.l.b16 %v548
      %v1115 = vunpack.c.h.b16 %v548
      %v1116 = vunpack.c.l.b16 %v549
      %v1117 = vunpack.c.h.b16 %v549
      %v1118 = vunpack.c.l.b16 %v550
      %v1119 = vunpack.c.h.b16 %v550
      %v1120 = vunpack.c.l.b16 %v551
      %v1121 = vunpack.c.h.b16 %v551
      %v1122 = vunpack.c.l.b16 %v552
      %v1123 = vunpack.c.h.b16 %v552
      %v1124 = vunpack.c.l.b16 %v553
      %v1125 = vunpack.c.h.b16 %v553
      %v1126 = vunpack.c.l.b16 %v554
      %v1127 = vunpack.c.h.b16 %v554
      %v1128 = vunpack.c.l.b16 %v555
      %v1129 = vunpack.c.h.b16 %v555
      %v1130 = vunpack.c.l.b16 %v556
      %v1131 = vunpack.c.h.b16 %v556
      %v1132 = vunpack.c.l.b16 %v557
      %v1133 = vunpack.c.h.b16 %v557
      %v1134 = vunpack.c.l.b16 %v558
      %v1135 = vunpack.c.h.b16 %v558
      %v1136 = vpack.c.b16 %v756, %v752
      %v1137 = vpack.c.b16 %v757, %v753
      %v1138 = vpack.c.b16 %v758, %v754
      %v1139 = vpack.c.b16 %v759, %v755
      %v1140 = vpack.c.b16 %v764, %v760
      %v1141 = vpack.c.b16 %v765, %v761
      %v1142 = vpack.c.b16 %v766, %v762
      %v1143 = vpack.c.b16 %v767, %v763
      %v1144 = vpack.c.b16 %v772, %v768
      %v1145 = vpack.c.b16 %v773, %v769
      %v1146 = vpack.c.b16 %v774, %v770
      %v1147 = vpack.c.b16 %v775, %v771
      %v1148 = vpack.c.b16 %v780, %v776
      %v1149 = vpack.c.b16 %v781, %v777
      %v1150 = vpack.c.b16 %v782, %v778
      %v1151 = vpack.c.b16 %v783, %v779
      %v1152 = vpack.c.b16 %v788, %v784
      %v1153 = vpack.c.b16 %v789, %v785
      %v1154 = vpack.c.b16 %v790, %v786
      %v1155 = vpack.c.b16 %v791, %v787
      %v1156 = vpack.c.b16 %v796, %v792
      %v1157 = vpack.c.b16 %v797, %v793
      %v1158 = vpack.c.b16 %v798, %v794
      %v1159 = vpack.c.b16 %v799, %v795
      %v1160 = vpack.c.b16 %v804, %v800
      %v1161 = vpack.c.b16 %v805, %v801
      %v1162 = vpack.c.b16 %v806, %v802
      %v1163 = vpack.c.b16 %v807, %v803
      %v1164 = vpack.c.b16 %v812, %v808
      %v1165 = vpack.c.b16 %v813, %v809
      %v1166 = vpack.c.b16 %v814, %v810
      %v1167 = vpack.c.b16 %v815, %v811
      %v1168 = vpack.c.b16 %v820, %v816
      %v1169 = vpack.c.b16 %v821, %v817
      %v1170 = vpack.c.b16 %v822, %v818
      %v1171 = vpack.c.b16 %v823, %v819
      %v1172 = vpack.c.b16 %v828, %v824
      %v1173 = vpack.c.b16 %v829, %v825
      %v1174 = vpack.c.b16 %v830, %v826
      %v1175 = vpack.c.b16 %v831, %v827
      %v1176 = vpack.c.b16 %v836, %v832
      %v1177 = vpack.c.b16 %v837, %v833
      %v1178 = vpack.c.b16 %v838, %v834
      %v1179 = vpack.c.b16 %v839, %v835
      %v1180 = vpack.c.b16 %v844, %v840
      %v1181 = vpack.c.b16 %v845, %v841
      %v1182 = vpack.c.b16 %v846, %v842
      %v1183 = vpack.c.b16 %v847, %v843
      %v1184 = vpack.c.b16 %v852, %v848
      %v1185 = vpack.c.b16 %v853, %v849
      %v1186 = vpack.c.b16 %v854, %v850
      %v1187 = vpack.c.b16 %v855, %v851
      %v1188 = vpack.c.b16 %v860, %v856
      %v1189 = vpack.c.b16 %v861, %v857
      %v1190 = vpack.c.b16 %v862, %v858
      %v1191 = vpack.c.b16 %v863, %v859
      %v1192 = vpack.c.b16 %v868, %v864
      %v1193 = vpack.c.b16 %v869, %v865
      %v1194 = vpack.c.b16 %v870, %v866
      %v1195 = vpack.c.b16 %v871, %v867
      %v1196 = vpack.c.b16 %v876, %v872
      %v1197 = vpack.c.b16 %v877, %v873
      %v1198 = vpack.c.b16 %v878, %v874
      %v1199 = vpack.c.b16 %v879, %v875
      %v1200 = vpack.c.b16 %v884, %v880
      %v1201 = vpack.c.b16 %v885, %v881
      %v1202 = vpack.c.b16 %v886, %v882
      %v1203 = vpack.c.b16 %v887, %v883
      %v1204 = vpack.c.b16 %v892, %v888
      %v1205 = vpack.c.b16 %v893, %v889
      %v1206 = vpack.c.b16 %v894, %v890
      %v1207 = vpack.c.b16 %v895, %v891
      %v1208 = vpack.c.b16 %v900, %v896
      %v1209 = vpack.c.b16 %v901, %v897
      %v1210 = vpack.c.b16 %v902, %v898
      %v1211 = vpack.c.b16 %v903, %v899
      %v1212 = vpack.c.b16 %v908, %v904
      %v1213 = vpack.c.b16 %v909, %v905
      %v1214 = vpack.c.b16 %v910, %v906
      %v1215 = vpack.c.b16 %v911, %v907
      %v1216 = vpack.c.b16 %v916, %v912
      %v1217 = vpack.c.b16 %v917, %v913
      %v1218 = vpack.c.b16 %v918, %v914
      %v1219 = vpack.c.b16 %v919, %v915
      %v1220 = vpack.c.b16 %v924, %v920
      %v1221 = vpack.c.b16 %v925, %v921
      %v1222 = vpack.c.b16 %v926, %v922
      %v1223 = vpack.c.b16 %v927, %v923
      %v1224 = vpack.c.b16 %v932, %v928
      %v1225 = vpack.c.b16 %v933, %v929
      %v1226 = vpack.c.b16 %v934, %v930
      %v1227 = vpack.c.b16 %v935, %v931
      %v1228 = vpack.c.b16 %v940, %v936
      %v1229 = vpack.c.b16 %v941, %v937
      %v1230 = vpack.c.b16 %v942, %v938
      %v1231 = vpack.c.b16 %v943, %v939
      %v1232 = vpack.c.b16 %v948, %v944
      %v1233 = vpack.c.b16 %v949, %v945
      %v1234 = vpack.c.b16 %v950, %v946
      %v1235 = vpack.c.b16 %v951, %v947
      %v1236 = vpack.c.b16 %v956, %v952
      %v1237 = vpack.c.b16 %v957, %v953
      %v1238 = vpack.c.b16 %v958, %v954
      %v1239 = vpack.c.b16 %v959, %v955
      %v1240 = vpack.c.b16 %v964, %v960
      %v1241 = vpack.c.b16 %v965, %v961
      %v1242 = vpack.c.b16 %v966, %v962
      %v1243 = vpack.c.b16 %v967, %v963
      %v1244 = vpack.c.b16 %v972, %v968
      %v1245 = vpack.c.b16 %v973, %v969
      %v1246 = vpack.c.b16 %v974, %v970
      %v1247 = vpack.c.b16 %v975, %v971
      %v1248 = vpack.c.b16 %v980, %v976
      %v1249 = vpack.c.b16 %v981, %v977
      %v1250 = vpack.c.b16 %v982, %v978
      %v1251 = vpack.c.b16 %v983, %v979
      %v1252 = vpack.c.b16 %v988, %v984
      %v1253 = vpack.c.b16 %v989, %v985
      %v1254 = vpack.c.b16 %v990, %v986
      %v1255 = vpack.c.b16 %v991, %v987
      %v1256 = vpack.c.b16 %v996, %v992
      %v1257 = vpack.c.b16 %v997, %v993
      %v1258 = vpack.c.b16 %v998, %v994
      %v1259 = vpack.c.b16 %v999, %v995
      %v1260 = vpack.c.b16 %v1004, %v1000
      %v1261 = vpack.c.b16 %v1005, %v1001
      %v1262 = vpack.c.b16 %v1006, %v1002
      %v1263 = vpack.c.b16 %v1007, %v1003
      %v1264 = vpack.c.b16 %v1012, %v1008
      %v1265 = vpack.c.b16 %v1013, %v1009
      %v1266 = vpack.c.b16 %v1014, %v1010
      %v1267 = vpack.c.b16 %v1015, %v1011
      %v1268 = vpack.c.b16 %v1020, %v1016
      %v1269 = vpack.c.b16 %v1021, %v1017
      %v1270 = vpack.c.b16 %v1022, %v1018
      %v1271 = vpack.c.b16 %v1023, %v1019
      %v1272 = vpack.c.b16 %v1028, %v1024
      %v1273 = vpack.c.b16 %v1029, %v1025
      %v1274 = vpack.c.b16 %v1030, %v1026
      %v1275 = vpack.c.b16 %v1031, %v1027
      %v1276 = vpack.c.b16 %v1036, %v1032
      %v1277 = vpack.c.b16 %v1037, %v1033
      %v1278 = vpack.c.b16 %v1038, %v1034
      %v1279 = vpack.c.b16 %v1039, %v1035
      %v1280 = vpack.c.b16 %v1044, %v1040
      %v1281 = vpack.c.b16 %v1045, %v1041
      %v1282 = vpack.c.b16 %v1046, %v1042
      %v1283 = vpack.c.b16 %v1047, %v1043
      %v1284 = vpack.c.b16 %v1052, %v1048
      %v1285 = vpack.c.b16 %v1053, %v1049
      %v1286 = vpack.c.b16 %v1054, %v1050
      %v1287 = vpack.c.b16 %v1055, %v1051
      %v1288 = vpack.c.b16 %v1060, %v1056
      %v1289 = vpack.c.b16 %v1061, %v1057
      %v1290 = vpack.c.b16 %v1062, %v1058
      %v1291 = vpack.c.b16 %v1063, %v1059
      %v1292 = vpack.c.b16 %v1068, %v1064
      %v1293 = vpack.c.b16 %v1069, %v1065
      %v1294 = vpack.c.b16 %v1070, %v1066
      %v1295 = vpack.c.b16 %v1071, %v1067
      %v1296 = vpack.c.b16 %v1076, %v1072
      %v1297 = vpack.c.b16 %v1077, %v1073
      %v1298 = vpack.c.b16 %v1078, %v1074
      %v1299 = vpack.c.b16 %v1079, %v1075
      %v1300 = vpack.c.b16 %v1084, %v1080
      %v1301 = vpack.c.b16 %v1085, %v1081
      %v1302 = vpack.c.b16 %v1086, %v1082
      %v1303 = vpack.c.b16 %v1087, %v1083
      %v1304 = vpack.c.b16 %v1092, %v1088
      %v1305 = vpack.c.b16 %v1093, %v1089
      %v1306 = vpack.c.b16 %v1094, %v1090
      %v1307 = vpack.c.b16 %v1095, %v1091
      %v1308 = vpack.c.b16 %v1100, %v1096
      %v1309 = vpack.c.b16 %v1101, %v1097
      %v1310 = vpack.c.b16 %v1102, %v1098
      %v1311 = vpack.c.b16 %v1103, %v1099
      %v1312 = vpack.c.b16 %v1108, %v1104
      %v1313 = vpack.c.b16 %v1109, %v1105
      %v1314 = vpack.c.b16 %v1110, %v1106
      %v1315 = vpack.c.b16 %v1111, %v1107
      %v1316 = vpack.c.b16 %v1116, %v1112
      %v1317 = vpack.c.b16 %v1117, %v1113
      %v1318 = vpack.c.b16 %v1118, %v1114
      %v1319 = vpack.c.b16 %v1119, %v1115
      %v1320 = vpack.c.b16 %v1124, %v1120
      %v1321 = vpack.c.b16 %v1125, %v1121
      %v1322 = vpack.c.b16 %v1126, %v1122
      %v1323 = vpack.c.b16 %v1127, %v1123
      %v1324 = vpack.c.b16 %v1132, %v1128
      %v1325 = vpack.c.b16 %v1133, %v1129
      %v1326 = vpack.c.b16 %v1134, %v1130
      %v1327 = vpack.c.b16 %v1135, %v1131
      %1521 = vst [vmem:[#allocation1] ss:$4 sm:$0xff] %v559
      %v1522 = vld.sshfl [vmem:[#allocation1] sm:$0xff pattern:$0x73625140]
      %v1523 = vld.sshfl [vmem:[#allocation1 + $0x8] sm:$0xff pattern:$0x73625140]
      %v1524 = vld.sshfl [vmem:[#allocation1 + $0x10] sm:$0xff pattern:$0x73625140]
      %v1525 = vld.sshfl [vmem:[#allocation1 + $0x18] sm:$0xff pattern:$0x73625140]
      %1530 = vmatpush.bf16.msra.mxu0 %v1164
      %1531 = vmatpush.bf16.msra.mxu0 %v1160
      %1532 = vmatpush.bf16.msra.mxu0 %v1156
      %1533 = vmatpush.bf16.msra.mxu0 %v1152
      %1534 = vmatpush.bf16.msra.mxu0 %v1148
      %1535 = vmatpush.bf16.msra.mxu0 %v1144
      %1536 = vmatpush.bf16.msra.mxu0 %v1140
      %1537 = vmatpush.bf16.msra.mxu0 %v1136
      %1538 = vmatmul.bf16.gmra.mxu0 %v361
      %v1539 = vpop.f32.mrf.mxu0
      %v1540 = vadd.f32 %v1522, %v1539
      %v1541 = vpop.f32.mrf.mxu0
      %1542 = vdwg.mxu0
      %1543 = vmatpush.bf16.msra.mxu0 %v1196
      %1544 = vmatpush.bf16.msra.mxu0 %v1192
      %1545 = vmatpush.bf16.msra.mxu0 %v1188
      %1546 = vmatpush.bf16.msra.mxu0 %v1184
      %1547 = vmatpush.bf16.msra.mxu0 %v1180
      %1548 = vmatpush.bf16.msra.mxu0 %v1176
      %1549 = vmatpush.bf16.msra.mxu0 %v1172
      %1550 = vmatpush.bf16.msra.mxu0 %v1168
      %1551 = vmatmul.bf16.gmra.mxu0 %v362
      %v1552 = vpop.f32.mrf.mxu0
      %v1553 = vadd.f32 %v1540, %v1552
      %v1554 = vpop.f32.mrf.mxu0
      %1555 = vdwg.mxu0
      %1556 = vmatpush.bf16.msra.mxu0 %v1228
      %1557 = vmatpush.bf16.msra.mxu0 %v1224
      %1558 = vmatpush.bf16.msra.mxu0 %v1220
      %1559 = vmatpush.bf16.msra.mxu0 %v1216
      %1560 = vmatpush.bf16.msra.mxu0 %v1212
      %1561 = vmatpush.bf16.msra.mxu0 %v1208
      %1562 = vmatpush.bf16.msra.mxu0 %v1204
      %1563 = vmatpush.bf16.msra.mxu0 %v1200
      %1564 = vmatmul.bf16.gmra.mxu0 %v363
      %v1565 = vpop.f32.mrf.mxu0
      %v1566 = vadd.f32 %v1553, %v1565
      %v1567 = vpop.f32.mrf.mxu0
      %1568 = vdwg.mxu0
      %1569 = vmatpush.bf16.msra.mxu0 %v1260
      %1570 = vmatpush.bf16.msra.mxu0 %v1256
      %1571 = vmatpush.bf16.msra.mxu0 %v1252
      %1572 = vmatpush.bf16.msra.mxu0 %v1248
      %1573 = vmatpush.bf16.msra.mxu0 %v1244
      %1574 = vmatpush.bf16.msra.mxu0 %v1240
      %1575 = vmatpush.bf16.msra.mxu0 %v1236
      %1576 = vmatpush.bf16.msra.mxu0 %v1232
      %1577 = vmatmul.bf16.gmra.mxu0 %v364
      %v1578 = vpop.f32.mrf.mxu0
      %v1579 = vadd.f32 %v1566, %v1578
      %v1580 = vpop.f32.mrf.mxu0
      %1581 = vdwg.mxu0
      %1582 = vmatpush.bf16.msra.mxu0 %v1292
      %1583 = vmatpush.bf16.msra.mxu0 %v1288
      %1584 = vmatpush.bf16.msra.mxu0 %v1284
      %1585 = vmatpush.bf16.msra.mxu0 %v1280
      %1586 = vmatpush.bf16.msra.mxu0 %v1276
      %1587 = vmatpush.bf16.msra.mxu0 %v1272
      %1588 = vmatpush.bf16.msra.mxu0 %v1268
      %1589 = vmatpush.bf16.msra.mxu0 %v1264
      %1590 = vmatmul.bf16.gmra.mxu0 %v365
      %v1591 = vpop.f32.mrf.mxu0
      %v1592 = vadd.f32 %v1579, %v1591
      %v1593 = vpop.f32.mrf.mxu0
      %1594 = vdwg.mxu0
      %1595 = vmatpush.bf16.msra.mxu0 %v1324
      %1596 = vmatpush.bf16.msra.mxu0 %v1320
      %1597 = vmatpush.bf16.msra.mxu0 %v1316
      %1598 = vmatpush.bf16.msra.mxu0 %v1312
      %1599 = vmatpush.bf16.msra.mxu0 %v1308
      %1600 = vmatpush.bf16.msra.mxu0 %v1304
      %1601 = vmatpush.bf16.msra.mxu0 %v1300
      %1602 = vmatpush.bf16.msra.mxu0 %v1296
      %1603 = vmatmul.bf16.gmra.mxu0 %v366
      %v1604 = vpop.f32.mrf.mxu0
      %v1605 = vadd.f32 %v1592, %v1604
      %v1606 = vpop.f32.mrf.mxu0
      %1607 = vdwg.mxu0
      %1608 = vmatpush.bf16.msra.mxu0 %v1165
      %1609 = vmatpush.bf16.msra.mxu0 %v1161
      %1610 = vmatpush.bf16.msra.mxu0 %v1157
      %1611 = vmatpush.bf16.msra.mxu0 %v1153
      %1612 = vmatpush.bf16.msra.mxu0 %v1149
      %1613 = vmatpush.bf16.msra.mxu0 %v1145
      %1614 = vmatpush.bf16.msra.mxu0 %v1141
      %1615 = vmatpush.bf16.msra.mxu0 %v1137
      %1616 = vmatmul.bf16.gmra.mxu0 %v361
      %v1617 = vpop.f32.mrf.mxu0
      %v1618 = vadd.f32 %v1523, %v1617
      %v1619 = vpop.f32.mrf.mxu0
      %1620 = vdwg.mxu0
      %1621 = vmatpush.bf16.msra.mxu0 %v1197
      %1622 = vmatpush.bf16.msra.mxu0 %v1193
      %1623 = vmatpush.bf16.msra.mxu0 %v1189
      %1624 = vmatpush.bf16.msra.mxu0 %v1185
      %1625 = vmatpush.bf16.msra.mxu0 %v1181
      %1626 = vmatpush.bf16.msra.mxu0 %v1177
      %1627 = vmatpush.bf16.msra.mxu0 %v1173
      %1628 = vmatpush.bf16.msra.mxu0 %v1169
      %1629 = vmatmul.bf16.gmra.mxu0 %v362
      %v1630 = vpop.f32.mrf.mxu0
      %v1631 = vadd.f32 %v1618, %v1630
      %v1632 = vpop.f32.mrf.mxu0
      %1633 = vdwg.mxu0
      %1634 = vmatpush.bf16.msra.mxu0 %v1229
      %1635 = vmatpush.bf16.msra.mxu0 %v1225
      %1636 = vmatpush.bf16.msra.mxu0 %v1221
      %1637 = vmatpush.bf16.msra.mxu0 %v1217
      %1638 = vmatpush.bf16.msra.mxu0 %v1213
      %1639 = vmatpush.bf16.msra.mxu0 %v1209
      %1640 = vmatpush.bf16.msra.mxu0 %v1205
      %1641 = vmatpush.bf16.msra.mxu0 %v1201
      %1642 = vmatmul.bf16.gmra.mxu0 %v363
      %v1643 = vpop.f32.mrf.mxu0
      %v1644 = vadd.f32 %v1631, %v1643
      %v1645 = vpop.f32.mrf.mxu0
      %1646 = vdwg.mxu0
      %1647 = vmatpush.bf16.msra.mxu0 %v1261
      %1648 = vmatpush.bf16.msra.mxu0 %v1257
      %1649 = vmatpush.bf16.msra.mxu0 %v1253
      %1650 = vmatpush.bf16.msra.mxu0 %v1249
      %1651 = vmatpush.bf16.msra.mxu0 %v1245
      %1652 = vmatpush.bf16.msra.mxu0 %v1241
      %1653 = vmatpush.bf16.msra.mxu0 %v1237
      %1654 = vmatpush.bf16.msra.mxu0 %v1233
      %1655 = vmatmul.bf16.gmra.mxu0 %v364
      %v1656 = vpop.f32.mrf.mxu0
      %v1657 = vadd.f32 %v1644, %v1656
      %v1658 = vpop.f32.mrf.mxu0
      %1659 = vdwg.mxu0
      %1660 = vmatpush.bf16.msra.mxu0 %v1293
      %1661 = vmatpush.bf16.msra.mxu0 %v1289
      %1662 = vmatpush.bf16.msra.mxu0 %v1285
      %1663 = vmatpush.bf16.msra.mxu0 %v1281
      %1664 = vmatpush.bf16.msra.mxu0 %v1277
      %1665 = vmatpush.bf16.msra.mxu0 %v1273
      %1666 = vmatpush.bf16.msra.mxu0 %v1269
      %1667 = vmatpush.bf16.msra.mxu0 %v1265
      %1668 = vmatmul.bf16.gmra.mxu0 %v365
      %v1669 = vpop.f32.mrf.mxu0
      %v1670 = vadd.f32 %v1657, %v1669
      %v1671 = vpop.f32.mrf.mxu0
      %1672 = vdwg.mxu0
      %1673 = vmatpush.bf16.msra.mxu0 %v1325
      %1674 = vmatpush.bf16.msra.mxu0 %v1321
      %1675 = vmatpush.bf16.msra.mxu0 %v1317
      %1676 = vmatpush.bf16.msra.mxu0 %v1313
      %1677 = vmatpush.bf16.msra.mxu0 %v1309
      %1678 = vmatpush.bf16.msra.mxu0 %v1305
      %1679 = vmatpush.bf16.msra.mxu0 %v1301
      %1680 = vmatpush.bf16.msra.mxu0 %v1297
      %1681 = vmatmul.bf16.gmra.mxu0 %v366
      %v1682 = vpop.f32.mrf.mxu0
      %v1683 = vadd.f32 %v1670, %v1682
      %v1684 = vpop.f32.mrf.mxu0
      %1685 = vdwg.mxu0
      %1686 = vmatpush.bf16.msra.mxu0 %v1166
      %1687 = vmatpush.bf16.msra.mxu0 %v1162
      %1688 = vmatpush.bf16.msra.mxu0 %v1158
      %1689 = vmatpush.bf16.msra.mxu0 %v1154
      %1690 = vmatpush.bf16.msra.mxu0 %v1150
      %1691 = vmatpush.bf16.msra.mxu0 %v1146
      %1692 = vmatpush.bf16.msra.mxu0 %v1142
      %1693 = vmatpush.bf16.msra.mxu0 %v1138
      %1694 = vmatmul.bf16.gmra.mxu0 %v361
      %v1695 = vpop.f32.mrf.mxu0
      %v1696 = vadd.f32 %v1524, %v1695
      %v1697 = vpop.f32.mrf.mxu0
      %1698 = vdwg.mxu0
      %1699 = vmatpush.bf16.msra.mxu0 %v1198
      %1700 = vmatpush.bf16.msra.mxu0 %v1194
      %1701 = vmatpush.bf16.msra.mxu0 %v1190
      %1702 = vmatpush.bf16.msra.mxu0 %v1186
      %1703 = vmatpush.bf16.msra.mxu0 %v1182
      %1704 = vmatpush.bf16.msra.mxu0 %v1178
      %1705 = vmatpush.bf16.msra.mxu0 %v1174
      %1706 = vmatpush.bf16.msra.mxu0 %v1170
      %1707 = vmatmul.bf16.gmra.mxu0 %v362
      %v1708 = vpop.f32.mrf.mxu0
      %v1709 = vadd.f32 %v1696, %v1708
      %v1710 = vpop.f32.mrf.mxu0
      %1711 = vdwg.mxu0
      %1712 = vmatpush.bf16.msra.mxu0 %v1230
      %1713 = vmatpush.bf16.msra.mxu0 %v1226
      %1714 = vmatpush.bf16.msra.mxu0 %v1222
      %1715 = vmatpush.bf16.msra.mxu0 %v1218
      %1716 = vmatpush.bf16.msra.mxu0 %v1214
      %1717 = vmatpush.bf16.msra.mxu0 %v1210
      %1718 = vmatpush.bf16.msra.mxu0 %v1206
      %1719 = vmatpush.bf16.msra.mxu0 %v1202
      %1720 = vmatmul.bf16.gmra.mxu0 %v363
      %v1721 = vpop.f32.mrf.mxu0
      %v1722 = vadd.f32 %v1709, %v1721
      %v1723 = vpop.f32.mrf.mxu0
      %1724 = vdwg.mxu0
      %1725 = vmatpush.bf16.msra.mxu0 %v1262
      %1726 = vmatpush.bf16.msra.mxu0 %v1258
      %1727 = vmatpush.bf16.msra.mxu0 %v1254
      %1728 = vmatpush.bf16.msra.mxu0 %v1250
      %1729 = vmatpush.bf16.msra.mxu0 %v1246
      %1730 = vmatpush.bf16.msra.mxu0 %v1242
      %1731 = vmatpush.bf16.msra.mxu0 %v1238
      %1732 = vmatpush.bf16.msra.mxu0 %v1234
      %1733 = vmatmul.bf16.gmra.mxu0 %v364
      %v1734 = vpop.f32.mrf.mxu0
      %v1735 = vadd.f32 %v1722, %v1734
      %v1736 = vpop.f32.mrf.mxu0
      %1737 = vdwg.mxu0
      %1738 = vmatpush.bf16.msra.mxu0 %v1294
      %1739 = vmatpush.bf16.msra.mxu0 %v1290
      %1740 = vmatpush.bf16.msra.mxu0 %v1286
      %1741 = vmatpush.bf16.msra.mxu0 %v1282
      %1742 = vmatpush.bf16.msra.mxu0 %v1278
      %1743 = vmatpush.bf16.msra.mxu0 %v1274
      %1744 = vmatpush.bf16.msra.mxu0 %v1270
      %1745 = vmatpush.bf16.msra.mxu0 %v1266
      %1746 = vmatmul.bf16.gmra.mxu0 %v365
      %v1747 = vpop.f32.mrf.mxu0
      %v1748 = vadd.f32 %v1735, %v1747
      %v1749 = vpop.f32.mrf.mxu0
      %1750 = vdwg.mxu0
      %1751 = vmatpush.bf16.msra.mxu0 %v1326
      %1752 = vmatpush.bf16.msra.mxu0 %v1322
      %1753 = vmatpush.bf16.msra.mxu0 %v1318
      %1754 = vmatpush.bf16.msra.mxu0 %v1314
      %1755 = vmatpush.bf16.msra.mxu0 %v1310
      %1756 = vmatpush.bf16.msra.mxu0 %v1306
      %1757 = vmatpush.bf16.msra.mxu0 %v1302
      %1758 = vmatpush.bf16.msra.mxu0 %v1298
      %1759 = vmatmul.bf16.gmra.mxu0 %v366
      %v1760 = vpop.f32.mrf.mxu0
      %v1761 = vadd.f32 %v1748, %v1760
      %v1762 = vpop.f32.mrf.mxu0
      %1763 = vdwg.mxu0
      %1764 = vmatpush.bf16.msra.mxu0 %v1167
      %1765 = vmatpush.bf16.msra.mxu0 %v1163
      %1766 = vmatpush.bf16.msra.mxu0 %v1159
      %1767 = vmatpush.bf16.msra.mxu0 %v1155
      %1768 = vmatpush.bf16.msra.mxu0 %v1151
      %1769 = vmatpush.bf16.msra.mxu0 %v1147
      %1770 = vmatpush.bf16.msra.mxu0 %v1143
      %1771 = vmatpush.bf16.msra.mxu0 %v1139
      %1772 = vmatmul.bf16.gmra.mxu0 %v361
      %v1773 = vpop.f32.mrf.mxu0
      %v1774 = vadd.f32 %v1525, %v1773
      %v1775 = vpop.f32.mrf.mxu0
      %1776 = vdwg.mxu0
      %1777 = vmatpush.bf16.msra.mxu0 %v1199
      %1778 = vmatpush.bf16.msra.mxu0 %v1195
      %1779 = vmatpush.bf16.msra.mxu0 %v1191
      %1780 = vmatpush.bf16.msra.mxu0 %v1187
      %1781 = vmatpush.bf16.msra.mxu0 %v1183
      %1782 = vmatpush.bf16.msra.mxu0 %v1179
      %1783 = vmatpush.bf16.msra.mxu0 %v1175
      %1784 = vmatpush.bf16.msra.mxu0 %v1171
      %1785 = vmatmul.bf16.gmra.mxu0 %v362
      %v1786 = vpop.f32.mrf.mxu0
      %v1787 = vadd.f32 %v1774, %v1786
      %v1788 = vpop.f32.mrf.mxu0
      %1789 = vdwg.mxu0
      %1790 = vmatpush.bf16.msra.mxu0 %v1231
      %1791 = vmatpush.bf16.msra.mxu0 %v1227
      %1792 = vmatpush.bf16.msra.mxu0 %v1223
      %1793 = vmatpush.bf16.msra.mxu0 %v1219
      %1794 = vmatpush.bf16.msra.mxu0 %v1215
      %1795 = vmatpush.bf16.msra.mxu0 %v1211
      %1796 = vmatpush.bf16.msra.mxu0 %v1207
      %1797 = vmatpush.bf16.msra.mxu0 %v1203
      %1798 = vmatmul.bf16.gmra.mxu0 %v363
      %v1799 = vpop.f32.mrf.mxu0
      %v1800 = vadd.f32 %v1787, %v1799
      %v1801 = vpop.f32.mrf.mxu0
      %1802 = vdwg.mxu0
      %1803 = vmatpush.bf16.msra.mxu0 %v1263
      %1804 = vmatpush.bf16.msra.mxu0 %v1259
      %1805 = vmatpush.bf16.msra.mxu0 %v1255
      %1806 = vmatpush.bf16.msra.mxu0 %v1251
      %1807 = vmatpush.bf16.msra.mxu0 %v1247
      %1808 = vmatpush.bf16.msra.mxu0 %v1243
      %1809 = vmatpush.bf16.msra.mxu0 %v1239
      %1810 = vmatpush.bf16.msra.mxu0 %v1235
      %1811 = vmatmul.bf16.gmra.mxu0 %v364
      %v1812 = vpop.f32.mrf.mxu0
      %v1813 = vadd.f32 %v1800, %v1812
      %v1814 = vpop.f32.mrf.mxu0
      %1815 = vdwg.mxu0
      %1816 = vmatpush.bf16.msra.mxu0 %v1295
      %1817 = vmatpush.bf16.msra.mxu0 %v1291
      %1818 = vmatpush.bf16.msra.mxu0 %v1287
      %1819 = vmatpush.bf16.msra.mxu0 %v1283
      %1820 = vmatpush.bf16.msra.mxu0 %v1279
      %1821 = vmatpush.bf16.msra.mxu0 %v1275
      %1822 = vmatpush.bf16.msra.mxu0 %v1271
      %1823 = vmatpush.bf16.msra.mxu0 %v1267
      %1824 = vmatmul.bf16.gmra.mxu0 %v365
      %v1825 = vpop.f32.mrf.mxu0
      %v1826 = vadd.f32 %v1813, %v1825
      %v1827 = vpop.f32.mrf.mxu0
      %1828 = vdwg.mxu0
      %1829 = vmatpush.bf16.msra.mxu0 %v1327
      %1830 = vmatpush.bf16.msra.mxu0 %v1323
      %1831 = vmatpush.bf16.msra.mxu0 %v1319
      %1832 = vmatpush.bf16.msra.mxu0 %v1315
      %1833 = vmatpush.bf16.msra.mxu0 %v1311
      %1834 = vmatpush.bf16.msra.mxu0 %v1307
      %1835 = vmatpush.bf16.msra.mxu0 %v1303
      %1836 = vmatpush.bf16.msra.mxu0 %v1299
      %1837 = vmatmul.bf16.gmra.mxu0 %v366
      %v1838 = vpop.f32.mrf.mxu0
      %v1839 = vadd.f32 %v1826, %v1838
      %v1840 = vpop.f32.mrf.mxu0
      %1841 = vdwg.mxu0
      %vm1842 = vcmp.gt.f32.partialorder %v1605, 20.0
      %vm1843 = vcmp.gt.f32.partialorder %v1683, 20.0
      %vm1844 = vcmp.gt.f32.partialorder %v1761, 20.0
      %vm1845 = vcmp.gt.f32.partialorder %v1839, 20.0
      %v1846 = vmin.f32 %v1605, 20.0
      %v1847 = vmin.f32 %v1683, 20.0
      %v1848 = vmin.f32 %v1761, 20.0
      %v1849 = vmin.f32 %v1839, 20.0
      %v1850 = vmul.f32 %v1846, 1.442695
      %v1851 = vpow.pop %v1850
      %v1852 = vmul.f32 %v1847, 1.442695
      %v1853 = vpow.pop %v1852
      %v1854 = vmul.f32 %v1848, 1.442695
      %v1855 = vpow.pop %v1854
      %v1856 = vmul.f32 %v1849, 1.442695
      %v1857 = vpow.pop %v1856
      %v1858 = vadd.f32 %v1851, 1.0
      %v1859 = vlog2.pop %v1858
      %v1860 = vmul.f32 %v1859, 0.6931472
      %v1861 = vmul.f32 -0.5, %v1851
      %v1862 = vadd.f32 %v1861, 1.0
      %v1863 = vmul.f32 %v1862, %v1851
      %v1864 = vand.u32 2147483647, %v1851
      %vm1865 = vcmp.lt.f32.partialorder %v1864, 0.0004427343
      %v1866 = vsel %vm1865, %v1863, %v1860
      %v1867 = vadd.f32 %v1853, 1.0
      %v1868 = vlog2.pop %v1867
      %v1869 = vmul.f32 %v1868, 0.6931472
      %v1870 = vmul.f32 -0.5, %v1853
      %v1871 = vadd.f32 %v1870, 1.0
      %v1872 = vmul.f32 %v1871, %v1853
      %v1873 = vand.u32 2147483647, %v1853
      %vm1874 = vcmp.lt.f32.partialorder %v1873, 0.0004427343
      %v1875 = vsel %vm1874, %v1872, %v1869
      %v1876 = vadd.f32 %v1855, 1.0
      %v1877 = vlog2.pop %v1876
      %v1878 = vmul.f32 %v1877, 0.6931472
      %v1879 = vmul.f32 -0.5, %v1855
      %v1880 = vadd.f32 %v1879, 1.0
      %v1881 = vmul.f32 %v1880, %v1855
      %v1882 = vand.u32 2147483647, %v1855
      %vm1883 = vcmp.lt.f32.partialorder %v1882, 0.0004427343
      %v1884 = vsel %vm1883, %v1881, %v1878
      %v1885 = vadd.f32 %v1857, 1.0
      %v1886 = vlog2.pop %v1885
      %v1887 = vmul.f32 %v1886, 0.6931472
      %v1888 = vmul.f32 -0.5, %v1857
      %v1889 = vadd.f32 %v1888, 1.0
      %v1890 = vmul.f32 %v1889, %v1857
      %v1891 = vand.u32 2147483647, %v1857
      %vm1892 = vcmp.lt.f32.partialorder %v1891, 0.0004427343
      %v1893 = vsel %vm1892, %v1890, %v1887
      %v1894 = vsel %vm1842, %v1605, %v1866
      %v1895 = vsel %vm1843, %v1683, %v1875
      %v1896 = vsel %vm1844, %v1761, %v1884
      %v1897 = vsel %vm1845, %v1839, %v1893
      %v1898 = vtanh.pop %v1894
      %v1899 = vtanh.pop %v1895
      %v1900 = vtanh.pop %v1896
      %v1901 = vtanh.pop %v1897
      %v1902 = vmul.f32 %v1605, %v1898
      %v1903 = vmul.f32 %v1683, %v1899
      %v1904 = vmul.f32 %v1761, %v1900
      %v1905 = vmul.f32 %v1839, %v1901
      %v1906 = vpack.c.bf16 %v1902, %v1902
      %v1907 = vpack.c.bf16 %v1903, %v1903
      %v1908 = vpack.c.bf16 %v1904, %v1904
      %v1909 = vpack.c.bf16 %v1905, %v1905
      %v1910 = vld [vmem:[#allocation12] sm:$0xff]
      %v1911 = vld [vmem:[#allocation12 + $0x8] sm:$0xff]
      %v1912 = vld [vmem:[#allocation12 + $0x10] sm:$0xff]
      %v1913 = vld [vmem:[#allocation12 + $0x18] sm:$0xff]
      %v1914 = vld [vmem:[#allocation12 + $0x20] sm:$0xff]
      %v1915 = vld [vmem:[#allocation12 + $0x28] sm:$0xff]
      %v1916 = vld [vmem:[#allocation12 + $0x30] sm:$0xff]
      %v1917 = vld [vmem:[#allocation12 + $0x38] sm:$0xff]
      %v1918 = vld [vmem:[#allocation12 + $0x40] sm:$0xff]
      %v1919 = vld [vmem:[#allocation12 + $0x48] sm:$0xff]
      %v1920 = vld [vmem:[#allocation12 + $0x50] sm:$0xff]
      %v1921 = vld [vmem:[#allocation12 + $0x58] sm:$0xff]
      %v1922 = vld [vmem:[#allocation12 + $0x60] sm:$0xff]
      %v1923 = vld [vmem:[#allocation12 + $0x68] sm:$0xff]
      %v1924 = vld [vmem:[#allocation12 + $0x70] sm:$0xff]
      %v1925 = vld [vmem:[#allocation12 + $0x78] sm:$0xff]
      %v1926 = vld [vmem:[#allocation12 + $0x80] sm:$0xff]
      %v1927 = vld [vmem:[#allocation12 + $0x88] sm:$0xff]
      %v1928 = vld [vmem:[#allocation12 + $0x90] sm:$0xff]
      %v1929 = vld [vmem:[#allocation12 + $0x98] sm:$0xff]
      %v1930 = vld [vmem:[#allocation12 + $0xa0] sm:$0xff]
      %v1931 = vld [vmem:[#allocation12 + $0xa8] sm:$0xff]
      %v1932 = vld [vmem:[#allocation12 + $0xb0] sm:$0xff]
      %v1933 = vld [vmem:[#allocation12 + $0xb8] sm:$0xff]
      %v1934 = vld [vmem:[#allocation12 + $0xc0] sm:$0xff]
      %v1935 = vld [vmem:[#allocation12 + $0xc8] sm:$0xff]
      %v1936 = vld [vmem:[#allocation12 + $0xd0] sm:$0xff]
      %v1937 = vld [vmem:[#allocation12 + $0xd8] sm:$0xff]
      %v1938 = vld [vmem:[#allocation12 + $0xe0] sm:$0xff]
      %v1939 = vld [vmem:[#allocation12 + $0xe8] sm:$0xff]
      %v1940 = vld [vmem:[#allocation12 + $0xf0] sm:$0xff]
      %v1941 = vld [vmem:[#allocation12 + $0xf8] sm:$0xff]
      %v1942 = vld [vmem:[#allocation12 + $0x100] sm:$0xff]
      %v1943 = vld [vmem:[#allocation12 + $0x108] sm:$0xff]
      %v1944 = vld [vmem:[#allocation12 + $0x110] sm:$0xff]
      %v1945 = vld [vmem:[#allocation12 + $0x118] sm:$0xff]
      %v1946 = vld [vmem:[#allocation12 + $0x120] sm:$0xff]
      %v1947 = vld [vmem:[#allocation12 + $0x128] sm:$0xff]
      %v1948 = vld [vmem:[#allocation12 + $0x130] sm:$0xff]
      %v1949 = vld [vmem:[#allocation12 + $0x138] sm:$0xff]
      %v1950 = vld [vmem:[#allocation12 + $0x140] sm:$0xff]
      %v1951 = vld [vmem:[#allocation12 + $0x148] sm:$0xff]
      %v1952 = vld [vmem:[#allocation12 + $0x150] sm:$0xff]
      %v1953 = vld [vmem:[#allocation12 + $0x158] sm:$0xff]
      %v1954 = vld [vmem:[#allocation12 + $0x160] sm:$0xff]
      %v1955 = vld [vmem:[#allocation12 + $0x168] sm:$0xff]
      %v1956 = vld [vmem:[#allocation12 + $0x170] sm:$0xff]
      %v1957 = vld [vmem:[#allocation12 + $0x178] sm:$0xff]
      %v1958 = vld [vmem:[#allocation12 + $0x180] sm:$0xff]
      %v1959 = vld [vmem:[#allocation12 + $0x188] sm:$0xff]
      %v1960 = vld [vmem:[#allocation12 + $0x190] sm:$0xff]
      %v1961 = vld [vmem:[#allocation12 + $0x198] sm:$0xff]
      %v1962 = vld [vmem:[#allocation12 + $0x1a0] sm:$0xff]
      %v1963 = vld [vmem:[#allocation12 + $0x1a8] sm:$0xff]
      %v1964 = vld [vmem:[#allocation12 + $0x1b0] sm:$0xff]
      %v1965 = vld [vmem:[#allocation12 + $0x1b8] sm:$0xff]
      %v1966 = vld [vmem:[#allocation12 + $0x1c0] sm:$0xff]
      %v1967 = vld [vmem:[#allocation12 + $0x1c8] sm:$0xff]
      %v1968 = vld [vmem:[#allocation12 + $0x1d0] sm:$0xff]
      %v1969 = vld [vmem:[#allocation12 + $0x1d8] sm:$0xff]
      %v1970 = vld [vmem:[#allocation12 + $0x1e0] sm:$0xff]
      %v1971 = vld [vmem:[#allocation12 + $0x1e8] sm:$0xff]
      %v1972 = vld [vmem:[#allocation12 + $0x1f0] sm:$0xff]
      %v1973 = vld [vmem:[#allocation12 + $0x1f8] sm:$0xff]
      %v1974 = vld [vmem:[%s5] sm:$0x3]
      %v1976 = vperm.slane %v1974, 0
      %v1977 = vperm.slane %v1974, 1
      %v2044 = vunpack.c.l.b16 %v1910
      %v2045 = vunpack.c.h.b16 %v1910
      %v2046 = vunpack.c.l.b16 %v1911
      %v2047 = vunpack.c.h.b16 %v1911
      %v2048 = vunpack.c.l.b16 %v1912
      %v2049 = vunpack.c.h.b16 %v1912
      %v2050 = vunpack.c.l.b16 %v1913
      %v2051 = vunpack.c.h.b16 %v1913
      %v2052 = vunpack.c.l.b16 %v1914
      %v2053 = vunpack.c.h.b16 %v1914
      %v2054 = vunpack.c.l.b16 %v1915
      %v2055 = vunpack.c.h.b16 %v1915
      %v2056 = vunpack.c.l.b16 %v1916
      %v2057 = vunpack.c.h.b16 %v1916
      %v2058 = vunpack.c.l.b16 %v1917
      %v2059 = vunpack.c.h.b16 %v1917
      %v2060 = vunpack.c.l.b16 %v1918
      %v2061 = vunpack.c.h.b16 %v1918
      %v2062 = vunpack.c.l.b16 %v1919
      %v2063 = vunpack.c.h.b16 %v1919
      %v2064 = vunpack.c.l.b16 %v1920
      %v2065 = vunpack.c.h.b16 %v1920
      %v2066 = vunpack.c.l.b16 %v1921
      %v2067 = vunpack.c.h.b16 %v1921
      %v2068 = vunpack.c.l.b16 %v1922
      %v2069 = vunpack.c.h.b16 %v1922
      %v2070 = vunpack.c.l.b16 %v1923
      %v2071 = vunpack.c.h.b16 %v1923
      %v2072 = vunpack.c.l.b16 %v1924
      %v2073 = vunpack.c.h.b16 %v1924
      %v2074 = vunpack.c.l.b16 %v1925
      %v2075 = vunpack.c.h.b16 %v1925
      %v2076 = vunpack.c.l.b16 %v1926
      %v2077 = vunpack.c.h.b16 %v1926
      %v2078 = vunpack.c.l.b16 %v1927
      %v2079 = vunpack.c.h.b16 %v1927
      %v2080 = vunpack.c.l.b16 %v1928
      %v2081 = vunpack.c.h.b16 %v1928
      %v2082 = vunpack.c.l.b16 %v1929
      %v2083 = vunpack.c.h.b16 %v1929
      %v2084 = vunpack.c.l.b16 %v1930
      %v2085 = vunpack.c.h.b16 %v1930
      %v2086 = vunpack.c.l.b16 %v1931
      %v2087 = vunpack.c.h.b16 %v1931
      %v2088 = vunpack.c.l.b16 %v1932
      %v2089 = vunpack.c.h.b16 %v1932
      %v2090 = vunpack.c.l.b16 %v1933
      %v2091 = vunpack.c.h.b16 %v1933
      %v2092 = vunpack.c.l.b16 %v1934
      %v2093 = vunpack.c.h.b16 %v1934
      %v2094 = vunpack.c.l.b16 %v1935
      %v2095 = vunpack.c.h.b16 %v1935
      %v2096 = vunpack.c.l.b16 %v1936
      %v2097 = vunpack.c.h.b16 %v1936
      %v2098 = vunpack.c.l.b16 %v1937
      %v2099 = vunpack.c.h.b16 %v1937
      %v2100 = vunpack.c.l.b16 %v1938
      %v2101 = vunpack.c.h.b16 %v1938
      %v2102 = vunpack.c.l.b16 %v1939
      %v2103 = vunpack.c.h.b16 %v1939
      %v2104 = vunpack.c.l.b16 %v1940
      %v2105 = vunpack.c.h.b16 %v1940
      %v2106 = vunpack.c.l.b16 %v1941
      %v2107 = vunpack.c.h.b16 %v1941
      %v2108 = vunpack.c.l.b16 %v1942
      %v2109 = vunpack.c.h.b16 %v1942
      %v2110 = vunpack.c.l.b16 %v1943
      %v2111 = vunpack.c.h.b16 %v1943
      %v2112 = vunpack.c.l.b16 %v1944
      %v2113 = vunpack.c.h.b16 %v1944
      %v2114 = vunpack.c.l.b16 %v1945
      %v2115 = vunpack.c.h.b16 %v1945
      %v2116 = vunpack.c.l.b16 %v1946
      %v2117 = vunpack.c.h.b16 %v1946
      %v2118 = vunpack.c.l.b16 %v1947
      %v2119 = vunpack.c.h.b16 %v1947
      %v2120 = vunpack.c.l.b16 %v1948
      %v2121 = vunpack.c.h.b16 %v1948
      %v2122 = vunpack.c.l.b16 %v1949
      %v2123 = vunpack.c.h.b16 %v1949
      %v2124 = vunpack.c.l.b16 %v1950
      %v2125 = vunpack.c.h.b16 %v1950
      %v2126 = vunpack.c.l.b16 %v1951
      %v2127 = vunpack.c.h.b16 %v1951
      %v2128 = vunpack.c.l.b16 %v1952
      %v2129 = vunpack.c.h.b16 %v1952
      %v2130 = vunpack.c.l.b16 %v1953
      %v2131 = vunpack.c.h.b16 %v1953
      %v2132 = vunpack.c.l.b16 %v1954
      %v2133 = vunpack.c.h.b16 %v1954
      %v2134 = vunpack.c.l.b16 %v1955
      %v2135 = vunpack.c.h.b16 %v1955
      %v2136 = vunpack.c.l.b16 %v1956
      %v2137 = vunpack.c.h.b16 %v1956
      %v2138 = vunpack.c.l.b16 %v1957
      %v2139 = vunpack.c.h.b16 %v1957
      %v2140 = vunpack.c.l.b16 %v1958
      %v2141 = vunpack.c.h.b16 %v1958
      %v2142 = vunpack.c.l.b16 %v1959
      %v2143 = vunpack.c.h.b16 %v1959
      %v2144 = vunpack.c.l.b16 %v1960
      %v2145 = vunpack.c.h.b16 %v1960
      %v2146 = vunpack.c.l.b16 %v1961
      %v2147 = vunpack.c.h.b16 %v1961
      %v2148 = vunpack.c.l.b16 %v1962
      %v2149 = vunpack.c.h.b16 %v1962
      %v2150 = vunpack.c.l.b16 %v1963
      %v2151 = vunpack.c.h.b16 %v1963
      %v2152 = vunpack.c.l.b16 %v1964
      %v2153 = vunpack.c.h.b16 %v1964
      %v2154 = vunpack.c.l.b16 %v1965
      %v2155 = vunpack.c.h.b16 %v1965
      %v2156 = vunpack.c.l.b16 %v1966
      %v2157 = vunpack.c.h.b16 %v1966
      %v2158 = vunpack.c.l.b16 %v1967
      %v2159 = vunpack.c.h.b16 %v1967
      %v2160 = vunpack.c.l.b16 %v1968
      %v2161 = vunpack.c.h.b16 %v1968
      %v2162 = vunpack.c.l.b16 %v1969
      %v2163 = vunpack.c.h.b16 %v1969
      %v2164 = vunpack.c.l.b16 %v1970
      %v2165 = vunpack.c.h.b16 %v1970
      %v2166 = vunpack.c.l.b16 %v1971
      %v2167 = vunpack.c.h.b16 %v1971
      %v2168 = vunpack.c.l.b16 %v1972
      %v2169 = vunpack.c.h.b16 %v1972
      %v2170 = vunpack.c.l.b16 %v1973
      %v2171 = vunpack.c.h.b16 %v1973
      %v2172 = vpack.c.b16 %v2046, %v2044
      %v2173 = vpack.c.b16 %v2047, %v2045
      %v2174 = vpack.c.b16 %v2050, %v2048
      %v2175 = vpack.c.b16 %v2051, %v2049
      %v2176 = vpack.c.b16 %v2054, %v2052
      %v2177 = vpack.c.b16 %v2055, %v2053
      %v2178 = vpack.c.b16 %v2058, %v2056
      %v2179 = vpack.c.b16 %v2059, %v2057
      %v2180 = vpack.c.b16 %v2062, %v2060
      %v2181 = vpack.c.b16 %v2063, %v2061
      %v2182 = vpack.c.b16 %v2066, %v2064
      %v2183 = vpack.c.b16 %v2067, %v2065
      %v2184 = vpack.c.b16 %v2070, %v2068
      %v2185 = vpack.c.b16 %v2071, %v2069
      %v2186 = vpack.c.b16 %v2074, %v2072
      %v2187 = vpack.c.b16 %v2075, %v2073
      %v2188 = vpack.c.b16 %v2078, %v2076
      %v2189 = vpack.c.b16 %v2079, %v2077
      %v2190 = vpack.c.b16 %v2082, %v2080
      %v2191 = vpack.c.b16 %v2083, %v2081
      %v2192 = vpack.c.b16 %v2086, %v2084
      %v2193 = vpack.c.b16 %v2087, %v2085
      %v2194 = vpack.c.b16 %v2090, %v2088
      %v2195 = vpack.c.b16 %v2091, %v2089
      %v2196 = vpack.c.b16 %v2094, %v2092
      %v2197 = vpack.c.b16 %v2095, %v2093
      %v2198 = vpack.c.b16 %v2098, %v2096
      %v2199 = vpack.c.b16 %v2099, %v2097
      %v2200 = vpack.c.b16 %v2102, %v2100
      %v2201 = vpack.c.b16 %v2103, %v2101
      %v2202 = vpack.c.b16 %v2106, %v2104
      %v2203 = vpack.c.b16 %v2107, %v2105
      %v2204 = vpack.c.b16 %v2110, %v2108
      %v2205 = vpack.c.b16 %v2111, %v2109
      %v2206 = vpack.c.b16 %v2114, %v2112
      %v2207 = vpack.c.b16 %v2115, %v2113
      %v2208 = vpack.c.b16 %v2118, %v2116
      %v2209 = vpack.c.b16 %v2119, %v2117
      %v2210 = vpack.c.b16 %v2122, %v2120
      %v2211 = vpack.c.b16 %v2123, %v2121
      %v2212 = vpack.c.b16 %v2126, %v2124
      %v2213 = vpack.c.b16 %v2127, %v2125
      %v2214 = vpack.c.b16 %v2130, %v2128
      %v2215 = vpack.c.b16 %v2131, %v2129
      %v2216 = vpack.c.b16 %v2134, %v2132
      %v2217 = vpack.c.b16 %v2135, %v2133
      %v2218 = vpack.c.b16 %v2138, %v2136
      %v2219 = vpack.c.b16 %v2139, %v2137
      %v2220 = vpack.c.b16 %v2142, %v2140
      %v2221 = vpack.c.b16 %v2143, %v2141
      %v2222 = vpack.c.b16 %v2146, %v2144
      %v2223 = vpack.c.b16 %v2147, %v2145
      %v2224 = vpack.c.b16 %v2150, %v2148
      %v2225 = vpack.c.b16 %v2151, %v2149
      %v2226 = vpack.c.b16 %v2154, %v2152
      %v2227 = vpack.c.b16 %v2155, %v2153
      %v2228 = vpack.c.b16 %v2158, %v2156
      %v2229 = vpack.c.b16 %v2159, %v2157
      %v2230 = vpack.c.b16 %v2162, %v2160
      %v2231 = vpack.c.b16 %v2163, %v2161
      %v2232 = vpack.c.b16 %v2166, %v2164
      %v2233 = vpack.c.b16 %v2167, %v2165
      %v2234 = vpack.c.b16 %v2170, %v2168
      %v2235 = vpack.c.b16 %v2171, %v2169
      %2300 = vmatpush.bf16.msra.mxu0 %v2186
      %2301 = vmatpush.bf16.msra.mxu0 %v2184
      %2302 = vmatpush.bf16.msra.mxu0 %v2182
      %2303 = vmatpush.bf16.msra.mxu0 %v2180
      %2304 = vmatpush.bf16.msra.mxu0 %v2178
      %2305 = vmatpush.bf16.msra.mxu0 %v2176
      %2306 = vmatpush.bf16.msra.mxu0 %v2174
      %2307 = vmatpush.bf16.msra.mxu0 %v2172
      %2308 = vmatmul.bf16.gmra.mxu0 %v1906
      %v2309 = vpop.f32.mrf.mxu0
      %v2310 = vadd.f32 %v1976, %v2309
      %v2311 = vpop.f32.mrf.mxu0
      %2312 = vdwg.mxu0
      %2313 = vmatpush.bf16.msra.mxu0 %v2202
      %2314 = vmatpush.bf16.msra.mxu0 %v2200
      %2315 = vmatpush.bf16.msra.mxu0 %v2198
      %2316 = vmatpush.bf16.msra.mxu0 %v2196
      %2317 = vmatpush.bf16.msra.mxu0 %v2194
      %2318 = vmatpush.bf16.msra.mxu0 %v2192
      %2319 = vmatpush.bf16.msra.mxu0 %v2190
      %2320 = vmatpush.bf16.msra.mxu0 %v2188
      %2321 = vmatmul.bf16.gmra.mxu0 %v1907
      %v2322 = vpop.f32.mrf.mxu0
      %v2323 = vadd.f32 %v2310, %v2322
      %v2324 = vpop.f32.mrf.mxu0
      %2325 = vdwg.mxu0
      %2326 = vmatpush.bf16.msra.mxu0 %v2218
      %2327 = vmatpush.bf16.msra.mxu0 %v2216
      %2328 = vmatpush.bf16.msra.mxu0 %v2214
      %2329 = vmatpush.bf16.msra.mxu0 %v2212
      %2330 = vmatpush.bf16.msra.mxu0 %v2210
      %2331 = vmatpush.bf16.msra.mxu0 %v2208
      %2332 = vmatpush.bf16.msra.mxu0 %v2206
      %2333 = vmatpush.bf16.msra.mxu0 %v2204
      %2334 = vmatmul.bf16.gmra.mxu0 %v1908
      %v2335 = vpop.f32.mrf.mxu0
      %v2336 = vadd.f32 %v2323, %v2335
      %v2337 = vpop.f32.mrf.mxu0
      %2338 = vdwg.mxu0
      %2339 = vmatpush.bf16.msra.mxu0 %v2234
      %2340 = vmatpush.bf16.msra.mxu0 %v2232
      %2341 = vmatpush.bf16.msra.mxu0 %v2230
      %2342 = vmatpush.bf16.msra.mxu0 %v2228
      %2343 = vmatpush.bf16.msra.mxu0 %v2226
      %2344 = vmatpush.bf16.msra.mxu0 %v2224
      %2345 = vmatpush.bf16.msra.mxu0 %v2222
      %2346 = vmatpush.bf16.msra.mxu0 %v2220
      %2347 = vmatmul.bf16.gmra.mxu0 %v1909
      %v2348 = vpop.f32.mrf.mxu0
      %v2349 = vadd.f32 %v2336, %v2348
      %v2350 = vpop.f32.mrf.mxu0
      %2351 = vdwg.mxu0
      %2352 = vmatpush.bf16.msra.mxu0 %v2187
      %2353 = vmatpush.bf16.msra.mxu0 %v2185
      %2354 = vmatpush.bf16.msra.mxu0 %v2183
      %2355 = vmatpush.bf16.msra.mxu0 %v2181
      %2356 = vmatpush.bf16.msra.mxu0 %v2179
      %2357 = vmatpush.bf16.msra.mxu0 %v2177
      %2358 = vmatpush.bf16.msra.mxu0 %v2175
      %2359 = vmatpush.bf16.msra.mxu0 %v2173
      %2360 = vmatmul.bf16.gmra.mxu0 %v1906
      %v2361 = vpop.f32.mrf.mxu0
      %v2362 = vadd.f32 %v1977, %v2361
      %v2363 = vpop.f32.mrf.mxu0
      %2364 = vdwg.mxu0
      %2365 = vmatpush.bf16.msra.mxu0 %v2203
      %2366 = vmatpush.bf16.msra.mxu0 %v2201
      %2367 = vmatpush.bf16.msra.mxu0 %v2199
      %2368 = vmatpush.bf16.msra.mxu0 %v2197
      %2369 = vmatpush.bf16.msra.mxu0 %v2195
      %2370 = vmatpush.bf16.msra.mxu0 %v2193
      %2371 = vmatpush.bf16.msra.mxu0 %v2191
      %2372 = vmatpush.bf16.msra.mxu0 %v2189
      %2373 = vmatmul.bf16.gmra.mxu0 %v1907
      %v2374 = vpop.f32.mrf.mxu0
      %v2375 = vadd.f32 %v2362, %v2374
      %v2376 = vpop.f32.mrf.mxu0
      %2377 = vdwg.mxu0
      %2378 = vmatpush.bf16.msra.mxu0 %v2219
      %2379 = vmatpush.bf16.msra.mxu0 %v2217
      %2380 = vmatpush.bf16.msra.mxu0 %v2215
      %2381 = vmatpush.bf16.msra.mxu0 %v2213
      %2382 = vmatpush.bf16.msra.mxu0 %v2211
      %2383 = vmatpush.bf16.msra.mxu0 %v2209
      %2384 = vmatpush.bf16.msra.mxu0 %v2207
      %2385 = vmatpush.bf16.msra.mxu0 %v2205
      %2386 = vmatmul.bf16.gmra.mxu0 %v1908
      %v2387 = vpop.f32.mrf.mxu0
      %v2388 = vadd.f32 %v2375, %v2387
      %v2389 = vpop.f32.mrf.mxu0
      %2390 = vdwg.mxu0
      %2391 = vmatpush.bf16.msra.mxu0 %v2235
      %2392 = vmatpush.bf16.msra.mxu0 %v2233
      %2393 = vmatpush.bf16.msra.mxu0 %v2231
      %2394 = vmatpush.bf16.msra.mxu0 %v2229
      %2395 = vmatpush.bf16.msra.mxu0 %v2227
      %2396 = vmatpush.bf16.msra.mxu0 %v2225
      %2397 = vmatpush.bf16.msra.mxu0 %v2223
      %2398 = vmatpush.bf16.msra.mxu0 %v2221
      %2399 = vmatmul.bf16.gmra.mxu0 %v1909
      %v2400 = vpop.f32.mrf.mxu0
      %v2401 = vadd.f32 %v2388, %v2400
      %v2402 = vpop.f32.mrf.mxu0
      %2403 = vdwg.mxu0
      %vm2404 = vcmp.gt.f32.partialorder %v2349, 20.0
      %vm2405 = vcmp.gt.f32.partialorder %v2401, 20.0
      %v2406 = vmin.f32 %v2349, 20.0
      %v2407 = vmin.f32 %v2401, 20.0
      %v2408 = vmul.f32 %v2406, 1.442695
      %v2409 = vpow.pop %v2408
      %v2410 = vmul.f32 %v2407, 1.442695
      %v2411 = vpow.pop %v2410
      %v2412 = vadd.f32 %v2409, 1.0
      %v2413 = vlog2.pop %v2412
      %v2414 = vmul.f32 %v2413, 0.6931472
      %v2415 = vmul.f32 -0.5, %v2409
      %v2416 = vadd.f32 %v2415, 1.0
      %v2417 = vmul.f32 %v2416, %v2409
      %v2418 = vand.u32 2147483647, %v2409
      %vm2419 = vcmp.lt.f32.partialorder %v2418, 0.0004427343
      %v2420 = vsel %vm2419, %v2417, %v2414
      %v2421 = vadd.f32 %v2411, 1.0
      %v2422 = vlog2.pop %v2421
      %v2423 = vmul.f32 %v2422, 0.6931472
      %v2424 = vmul.f32 -0.5, %v2411
      %v2425 = vadd.f32 %v2424, 1.0
      %v2426 = vmul.f32 %v2425, %v2411
      %v2427 = vand.u32 2147483647, %v2411
      %vm2428 = vcmp.lt.f32.partialorder %v2427, 0.0004427343
      %v2429 = vsel %vm2428, %v2426, %v2423
      %v2430 = vsel %vm2404, %v2349, %v2420
      %v2431 = vsel %vm2405, %v2401, %v2429
      %v2432 = vtanh.pop %v2430
      %v2433 = vtanh.pop %v2431
      %v2434 = vmul.f32 %v2349, %v2432
      %v2435 = vmul.f32 %v2401, %v2433
      %v2436 = vpack.c.bf16 %v2434, %v2434
      %v2437 = vpack.c.bf16 %v2435, %v2435
      %v2438 = vld [vmem:[#allocation13] sm:$0xf]
      %v2439 = vld [vmem:[#allocation13 + $0x4] sm:$0xf]
      %v2440 = vld [vmem:[#allocation13 + $0x8] sm:$0xf]
      %v2441 = vld [vmem:[#allocation13 + $0xc] sm:$0xf]
      %v2442 = vld [vmem:[#allocation13 + $0x10] sm:$0xf]
      %v2443 = vld [vmem:[#allocation13 + $0x14] sm:$0xf]
      %v2444 = vld [vmem:[#allocation13 + $0x18] sm:$0xf]
      %v2445 = vld [vmem:[#allocation13 + $0x1c] sm:$0xf]
      %v2446 = vld [vmem:[#allocation13 + $0x20] sm:$0xf]
      %v2447 = vld [vmem:[#allocation13 + $0x24] sm:$0xf]
      %v2448 = vld [vmem:[#allocation13 + $0x28] sm:$0xf]
      %v2449 = vld [vmem:[#allocation13 + $0x2c] sm:$0xf]
      %v2450 = vld [vmem:[#allocation13 + $0x30] sm:$0xf]
      %v2451 = vld [vmem:[#allocation13 + $0x34] sm:$0xf]
      %v2452 = vld [vmem:[#allocation13 + $0x38] sm:$0xf]
      %v2453 = vld [vmem:[#allocation13 + $0x3c] sm:$0xf]
      %v2454 = vld [vmem:[#allocation13 + $0x40] sm:$0xf]
      %v2455 = vld [vmem:[#allocation13 + $0x44] sm:$0xf]
      %v2456 = vld [vmem:[#allocation13 + $0x48] sm:$0xf]
      %v2457 = vld [vmem:[#allocation13 + $0x4c] sm:$0xf]
      %v2458 = vld [vmem:[#allocation13 + $0x50] sm:$0xf]
      %v2459 = vld [vmem:[#allocation13 + $0x54] sm:$0xf]
      %v2460 = vld [vmem:[#allocation13 + $0x58] sm:$0xf]
      %v2461 = vld [vmem:[#allocation13 + $0x5c] sm:$0xf]
      %v2462 = vld [vmem:[#allocation13 + $0x60] sm:$0xf]
      %v2463 = vld [vmem:[#allocation13 + $0x64] sm:$0xf]
      %v2464 = vld [vmem:[#allocation13 + $0x68] sm:$0xf]
      %v2465 = vld [vmem:[#allocation13 + $0x6c] sm:$0xf]
      %v2466 = vld [vmem:[#allocation13 + $0x70] sm:$0xf]
      %v2467 = vld [vmem:[#allocation13 + $0x74] sm:$0xf]
      %v2468 = vld [vmem:[#allocation13 + $0x78] sm:$0xf]
      %v2469 = vld [vmem:[#allocation13 + $0x7c] sm:$0xf]
      %v2470 = vld [vmem:[%s7] sm:$0x1]
      %v2472 = vperm.slane %v2470, 0
      %v2506 = vunpack.c.l.b16 %v2438
      %v2507 = vunpack.c.l.b16 %v2439
      %v2508 = vunpack.c.l.b16 %v2440
      %v2509 = vunpack.c.l.b16 %v2441
      %v2510 = vunpack.c.l.b16 %v2442
      %v2511 = vunpack.c.l.b16 %v2443
      %v2512 = vunpack.c.l.b16 %v2444
      %v2513 = vunpack.c.l.b16 %v2445
      %v2514 = vunpack.c.l.b16 %v2446
      %v2515 = vunpack.c.l.b16 %v2447
      %v2516 = vunpack.c.l.b16 %v2448
      %v2517 = vunpack.c.l.b16 %v2449
      %v2518 = vunpack.c.l.b16 %v2450
      %v2519 = vunpack.c.l.b16 %v2451
      %v2520 = vunpack.c.l.b16 %v2452
      %v2521 = vunpack.c.l.b16 %v2453
      %v2522 = vunpack.c.l.b16 %v2454
      %v2523 = vunpack.c.l.b16 %v2455
      %v2524 = vunpack.c.l.b16 %v2456
      %v2525 = vunpack.c.l.b16 %v2457
      %v2526 = vunpack.c.l.b16 %v2458
      %v2527 = vunpack.c.l.b16 %v2459
      %v2528 = vunpack.c.l.b16 %v2460
      %v2529 = vunpack.c.l.b16 %v2461
      %v2530 = vunpack.c.l.b16 %v2462
      %v2531 = vunpack.c.l.b16 %v2463
      %v2532 = vunpack.c.l.b16 %v2464
      %v2533 = vunpack.c.l.b16 %v2465
      %v2534 = vunpack.c.l.b16 %v2466
      %v2535 = vunpack.c.l.b16 %v2467
      %v2536 = vunpack.c.l.b16 %v2468
      %v2537 = vunpack.c.l.b16 %v2469
      %v2538 = vpack.c.b16 %v2507, %v2506
      %v2539 = vpack.c.b16 %v2509, %v2508
      %v2540 = vpack.c.b16 %v2511, %v2510
      %v2541 = vpack.c.b16 %v2513, %v2512
      %v2542 = vpack.c.b16 %v2515, %v2514
      %v2543 = vpack.c.b16 %v2517, %v2516
      %v2544 = vpack.c.b16 %v2519, %v2518
      %v2545 = vpack.c.b16 %v2521, %v2520
      %v2546 = vpack.c.b16 %v2523, %v2522
      %v2547 = vpack.c.b16 %v2525, %v2524
      %v2548 = vpack.c.b16 %v2527, %v2526
      %v2549 = vpack.c.b16 %v2529, %v2528
      %v2550 = vpack.c.b16 %v2531, %v2530
      %v2551 = vpack.c.b16 %v2533, %v2532
      %v2552 = vpack.c.b16 %v2535, %v2534
      %v2553 = vpack.c.b16 %v2537, %v2536
      %2570 = vmatpush.bf16.msra.mxu0 %v2545
      %2571 = vmatpush.bf16.msra.mxu0 %v2544
      %2572 = vmatpush.bf16.msra.mxu0 %v2543
      %2573 = vmatpush.bf16.msra.mxu0 %v2542
      %2574 = vmatpush.bf16.msra.mxu0 %v2541
      %2575 = vmatpush.bf16.msra.mxu0 %v2540
      %2576 = vmatpush.bf16.msra.mxu0 %v2539
      %2577 = vmatpush.bf16.msra.mxu0 %v2538
      %2578 = vmatmul.bf16.gmra.mxu0 %v2436
      %v2579 = vpop.f32.mrf.mxu0
      %v2580 = vadd.f32 %v2472, %v2579
      %v2581 = vpop.f32.mrf.mxu0
      %2582 = vdwg.mxu0
      %2583 = vmatpush.bf16.msra.mxu0 %v2553
      %2584 = vmatpush.bf16.msra.mxu0 %v2552
      %2585 = vmatpush.bf16.msra.mxu0 %v2551
      %2586 = vmatpush.bf16.msra.mxu0 %v2550
      %2587 = vmatpush.bf16.msra.mxu0 %v2549
      %2588 = vmatpush.bf16.msra.mxu0 %v2548
      %2589 = vmatpush.bf16.msra.mxu0 %v2547
      %2590 = vmatpush.bf16.msra.mxu0 %v2546
      %2591 = vmatmul.bf16.gmra.mxu0 %v2437
      %v2592 = vpop.f32.mrf.mxu0
      %v2593 = vadd.f32 %v2580, %v2592
      %v2594 = vpop.f32.mrf.mxu0
      %2595 = vdwg.mxu0
      %2596 = vst [vmem:[#allocation15] sm:$0x3] %v2593
    $region65: #{tpu_custom_call.1} parent=1 // pred_fallthru
      _
    // Predicated region
    $region66: #{tpu_custom_call.1} parent=1 // pred_check
      _
    $region67: #{tpu_custom_call.1} parent=1 // pred_check_branch
      %2598 = sbr.rel (0) target = $region69
    $region68: #{tpu_custom_call.1} parent=1 // pred_region
      %2600 = vsyncadd [#allocation6], 0
      %s2602 = sshll.u32 [#allocation15], 4
      %s2603 = int_to_ptr.vmem [resolvable:$true] %s2602
      %s2604 = sshll.u32 %s8, 4
      %s2605 = int_to_ptr.hbm [resolvable:$true] %s2604
      %2607 = dma.vmem_to_hbm [thread:$0]  %s2603, 32, %s2605, [#allocation6]
    $region69: #{tpu_custom_call.1} parent=1 // pred_fallthru
      _
    // Predicated region
    $region70: #{tpu_custom_call.1} parent=1 // pred_check
      _
    $region71: #{tpu_custom_call.1} parent=1 // pred_check_branch
      %2609 = sbr.rel (0) target = $region73
    $region72: #{tpu_custom_call.1} parent=1 // pred_region
      %2611 = dma.done [#allocation6], 32
    $region73: #{tpu_custom_call.1} parent=1 // pred_fallthru
      _
    %2612 = vsyncpa [#allocation5], 1
    %2613 = vsyncpa [#allocation8], 1
    %2614 = vsyncpa [#allocation11], 1
    %2615 = vsyncpa [#allocation14], 1
    %2616 = vsyncpa [#allocation6], 1

</llo_original>
